<compile_context>
chip_gen: v7x
topology: tpu7x:2x2x1
jax: 0.10.0
libtpu: 0.0.40
codegen_flags: <defaults>
</compile_context>

<pallas_src>
import numpy as np
import jax
import jax.numpy as jnp
from jax import lax
from jax.experimental import pallas as pl
from jax.experimental.pallas import tpu as pltpu

# ----------------------------------------------------------------------------
# Fixed geometry constants (deterministic, from the module's __init__).
# ----------------------------------------------------------------------------
_DISTANCE = 1800.0
_CENTER = 900.0
_CENTER_VOLUME = (127.5, 127.5, 127.5)
_TEMPERATURE = 10000.0

_TR_AP = np.array(
    [[1.0, 0.0, 0.0, 0.0],
     [0.0, 0.0, 1.0, -700.0],
     [0.0, -1.0, 0.0, 0.0],
     [0.0, 0.0, 0.0, 1.0]], dtype=np.float64)
_TR_LAT = np.array(
    [[0.0, 0.0, 1.0, -700.0],
     [-1.0, 0.0, 0.0, 0.0],
     [0.0, -1.0, 0.0, 0.0],
     [0.0, 0.0, 0.0, 1.0]], dtype=np.float64)

_TR_AP_INV = np.linalg.inv(_TR_AP)
_TR_LAT_INV = np.linalg.inv(_TR_LAT)

_R_AP = [[float(v) for v in row] for row in _TR_AP_INV[:3, :3]]
_T_AP = [float(v) for v in _TR_AP_INV[:3, 3]]
_R_LAT = [[float(v) for v in row] for row in _TR_LAT_INV[:3, :3]]
_T_LAT = [float(v) for v in _TR_LAT_INV[:3, 3]]


# ----------------------------------------------------------------------------
# Pallas kernel
# ----------------------------------------------------------------------------
def _make_triangulation_kernel(H, W):
    halfW = float(W) / 2.0
    halfH = float(H) / 2.0
    d = _DISTANCE
    c = _CENTER

    def kernel(ap_ref, lat_ref, coef_ref, out_ref):
        # ap_ref / lat_ref: (tile_rows, H*W) lane-dense VMEM blocks
        # coef_ref        : (H*W, 128) constant, cols = [1, x_idx, y_idx, 0..]
        # out_ref         : (tile_rows, 128) lane-dense output slab
        coef = coef_ref[...]

        def soft_argmax(ref):
            s = ref[...].astype(jnp.float32)                 # (T, H*W)
            logits = s * _TEMPERATURE
            m = jnp.max(logits, axis=-1, keepdims=True)      # XLU lane-reduce
            e = jnp.exp(logits - m)                          # EUP
            # One MXU matmul yields per-row [sum(e), sum(e*x), sum(e*y), 0..]
            mom = jnp.dot(e, coef,
                          preferred_element_type=jnp.float32,
                          precision=lax.Precision.HIGHEST)   # (T, 128)
            inv_z = 1.0 / mom[:, 0:1]
            x = mom[:, 1:2] * inv_z - halfW                  # (T, 1) centered
            y = mom[:, 2:3] * inv_z - halfH
            return x, y

        x_ap, y_ap = soft_argmax(ap_ref)
        x_lat, y_lat = soft_argmax(lat_ref)

        # A = [[D_x1 @ R_ap], [D_x2 @ R_lat]] with D = [[-d, 0, x], [0, -d, y]]
        # each A[k][j] is a (T, 1) array.
        A = [
            [-d * _R_AP[0][j] + x_ap * _R_AP[2][j] for j in range(3)],
            [-d * _R_AP[1][j] + y_ap * _R_AP[2][j] for j in range(3)],
            [-d * _R_LAT[0][j] + x_lat * _R_LAT[2][j] for j in range(3)],
            [-d * _R_LAT[1][j] + y_lat * _R_LAT[2][j] for j in range(3)],
        ]
        # b = [-c*idx - D @ t] for both views
        b = [
            -c * x_ap - (-d * _T_AP[0] + x_ap * _T_AP[2]),
            -c * y_ap - (-d * _T_AP[1] + y_ap * _T_AP[2]),
            -c * x_lat - (-d * _T_LAT[0] + x_lat * _T_LAT[2]),
            -c * y_lat - (-d * _T_LAT[1] + y_lat * _T_LAT[2]),
        ]

        # Normal equations: (A^T A) X = A^T b   (== pinv(A) @ b, A full rank)
        M = [[sum(A[k][i] * A[k][j] for k in range(4)) for j in range(3)]
             for i in range(3)]
        cv = [sum(A[k][i] * b[k] for k in range(4)) for i in range(3)]

        def det3(m):
            return (m[0][0] * (m[1][1] * m[2][2] - m[1][2] * m[2][1])
                    - m[0][1] * (m[1][0] * m[2][2] - m[1][2] * m[2][0])
                    + m[0][2] * (m[1][0] * m[2][1] - m[1][1] * m[2][0]))

        det = det3(M)
        # Guard against (near-)singular normal equations (only reachable from
        # padded/degenerate rows with the fixed two-view geometry).
        # TODO(synk): rank-deficient A would need true pinverse (least-norm)
        # semantics; not reproduced here.
        eps = jnp.float32(1e-20)
        det = jnp.where(jnp.abs(det) < eps,
                        jnp.where(det < 0, -eps, eps), det)
        inv_det = 1.0 / det

        X = []
        for col in range(3):
            Mc = [[cv[i] if j == col else M[i][j] for j in range(3)]
                  for i in range(3)]
            X.append(det3(Mc) * inv_det + _CENTER_VOLUME[col])   # (T, 1)

        # Lane-dense output: lane 0/1/2 hold x/y/z, remaining lanes are 0.
        lane = lax.broadcasted_iota(jnp.int32, out_ref.shape, 1)
        out = (jnp.where(lane == 0, X[0], 0.0)
               + jnp.where(lane == 1, X[1], 0.0)
               + jnp.where(lane == 2, X[2], 0.0))
        out_ref[...] = out.astype(out_ref.dtype)

    return kernel


def _round_up(x, m):
    return ((x + m - 1) // m) * m


def _moment_matrix(H, W, ncols=128):
    """(H*W, 128) constant: col0 = 1, col1 = x (width) idx, col2 = y (height) idx."""
    HW = H * W
    coef = np.zeros((HW, ncols), dtype=np.float32)
    flat = np.arange(HW)
    coef[:, 0] = 1.0
    coef[:, 1] = (flat % W).astype(np.float32)
    coef[:, 2] = (flat // W).astype(np.float32)
    return jnp.asarray(coef)


def triangulation_forward(score_map_ap, score_map_lat, *, tile_rows=None,
                          vmem_limit_bytes=None):
    """Pallas implementation of triangulation_layer.forward.

    score_map_ap, score_map_lat: (B, P, H, W) float arrays (f32 or bf16).
    returns: (B, P, 3) float32 fiducial 3D predictions.
    """
    B, P, H, W = score_map_ap.shape
    assert score_map_lat.shape == (B, P, H, W)
    rows = B * P
    HW = H * W

    if tile_rows is None:
        # ~512 KiB per input block keeps the mem-bound kernel near the HBM
        # roofline while fitting default scoped VMEM on v5e/v6e/v7x; also
        # expose >= 2 grid steps when possible (v7x has 2 TensorCores).
        target = max(8, ((512 * 1024) // (HW * 4)) // 8 * 8)
        half = _round_up(max(1, -(-rows // 2)), 8)
        tile_rows = max(8, min(target, half))
    tile_rows = max(8, _round_up(int(tile_rows), 8))
    rows_pad = _round_up(rows, tile_rows)
    num_tiles = rows_pad // tile_rows

    ap = score_map_ap.reshape(rows, HW)
    lat = score_map_lat.reshape(rows, HW)
    if rows_pad != rows:
        pad = ((0, rows_pad - rows), (0, 0))
        ap = jnp.pad(ap, pad)
        lat = jnp.pad(lat, pad)

    coef = _moment_matrix(H, W)
    kernel = _make_triangulation_kernel(H, W)

    out = pl.pallas_call(
        kernel,
        out_shape=jax.ShapeDtypeStruct((rows_pad, 128), jnp.float32),
        grid_spec=pltpu.PrefetchScalarGridSpec(
            num_scalar_prefetch=0,
            grid=(num_tiles,),
            in_specs=[
                pl.BlockSpec((tile_rows, HW), lambda r: (r, 0)),
                pl.BlockSpec((tile_rows, HW), lambda r: (r, 0)),
                pl.BlockSpec((HW, 128), lambda r: (0, 0)),   # constant, fetched once
            ],
            out_specs=pl.BlockSpec((tile_rows, 128), lambda r: (r, 0)),
        ),
        compiler_params=pltpu.CompilerParams(
            dimension_semantics=("parallel",),
            vmem_limit_bytes=vmem_limit_bytes,
        ),
    )(ap, lat, coef)

    return out[:rows, :3].reshape(B, P, 3)


# ----------------------------------------------------------------------------
# Pure-JAX reference (mirrors the PyTorch module) for a sanity check.
# ----------------------------------------------------------------------------
def _reference_forward(ap, lat):
    B, P, H, W = ap.shape

    def soft_argmax(s):
        logits = (s.astype(jnp.float32) * _TEMPERATURE).reshape(B, P, H * W)
        p = jax.nn.softmax(logits, axis=-1).reshape(B, P, H, W)
        xs = jnp.arange(W, dtype=jnp.float32)
        ys = jnp.arange(H, dtype=jnp.float32)
        x = jnp.sum(p * xs[None, None, None, :], axis=(2, 3))
        y = jnp.sum(p * ys[None, None, :, None], axis=(2, 3))
        return x, y

    x_ap, y_ap = soft_argmax(ap)
    x_lat, y_lat = soft_argmax(lat)
    x_ap = x_ap - W / 2.0
    y_ap = y_ap - H / 2.0
    x_lat = x_lat - W / 2.0
    y_lat = y_lat - H / 2.0

    K = jnp.array([[-_DISTANCE, 0.0], [0.0, -_DISTANCE]], dtype=jnp.float32)
    R_ap = jnp.array(_R_AP, dtype=jnp.float32)
    t_ap = jnp.array(_T_AP, dtype=jnp.float32)
    R_lat = jnp.array(_R_LAT, dtype=jnp.float32)
    t_lat = jnp.array(_T_LAT, dtype=jnp.float32)

    idx_ap = jnp.stack([x_ap, y_ap], axis=-1)      # (B, P, 2)
    idx_lat = jnp.stack([x_lat, y_lat], axis=-1)
    Kb = jnp.broadcast_to(K, (B, P, 2, 2))
    D1 = jnp.concatenate([Kb, idx_ap[..., None]], axis=-1)   # (B, P, 2, 3)
    D2 = jnp.concatenate([Kb, idx_lat[..., None]], axis=-1)
    A = jnp.concatenate([D1 @ R_ap, D2 @ R_lat], axis=-2)    # (B, P, 4, 3)
    b = jnp.concatenate([-_CENTER * idx_ap - D1 @ t_ap,
                         -_CENTER * idx_lat - D2 @ t_lat], axis=-1)  # (B,P,4)
    X = (jnp.linalg.pinv(A) @ b[..., None])[..., 0]
    return X + jnp.array(_CENTER_VOLUME, dtype=jnp.float32)


if __name__ == "__main__":
    key = jax.random.PRNGKey(0)
    k1, k2, k3, k4 = jax.random.split(key, 4)

    # Case 1: shapes implied by the module (B=2 batches, P=4 points, 16x16 maps).
    B, P, H, W = 2, 4, 16, 16
    score_map_ap = jax.random.normal(k1, (B, P, H, W), dtype=jnp.float32)
    score_map_lat = jax.random.normal(k2, (B, P, H, W), dtype=jnp.float32)
    out = jax.block_until_ready(triangulation_forward(score_map_ap, score_map_lat))
    ref = jax.block_until_ready(_reference_forward(score_map_ap, score_map_lat))
    assert out.shape == (B, P, 3), out.shape
    assert bool(jnp.all(jnp.isfinite(out)))
    np.testing.assert_allclose(np.asarray(out), np.asarray(ref),
                               rtol=2e-3, atol=0.5)

    # Case 2: non-divisible row count + rectangular maps -> exercises padding
    # and a multi-step ("parallel") grid.
    B2, P2, H2, W2 = 3, 5, 16, 24
    ap2 = jax.random.normal(k3, (B2, P2, H2, W2), dtype=jnp.float32)
    lat2 = jax.random.normal(k4, (B2, P2, H2, W2), dtype=jnp.float32)
    out2 = jax.block_until_ready(triangulation_forward(ap2, lat2))
    ref2 = jax.block_until_ready(_reference_forward(ap2, lat2))
    assert out2.shape == (B2, P2, 3), out2.shape
    assert bool(jnp.all(jnp.isfinite(out2)))
    np.testing.assert_allclose(np.asarray(out2), np.asarray(ref2),
                               rtol=2e-3, atol=0.5)

    print("KERNEL_OK")
</pallas_src>

<mosaic_0001>
module attributes {stable_mosaic.version = 11 : i64} {
  func.func @kernel(%arg0: i32, %arg1: memref<8x256xf32, #tpu.memory_space<vmem>>, %arg2: memref<8x256xf32, #tpu.memory_space<vmem>>, %arg3: memref<256x128xf32, #tpu.memory_space<vmem>>, %arg4: memref<8x128xf32, #tpu.memory_space<vmem>>) attributes {dimension_semantics = [#tpu.dimension_semantics<parallel>], iteration_bounds = array<i64: 1>, scalar_prefetch = 0 : i64, scratch_operands = 0 : i64, tpu.core_type = #tpu.core_type<tc>, window_params = [{transform_indices = @transform_0, window_bounds = array<i64: 8, 256>}, {transform_indices = @transform_1, window_bounds = array<i64: 8, 256>}, {pipeline_mode = #tpu.pipeline_mode<synchronous>, transform_indices = @transform_2, window_bounds = array<i64: 256, 128>}, {transform_indices = @transform_3, window_bounds = array<i64: 8, 128>}]} {
    %c0 = arith.constant 0 : index
    %c0_0 = arith.constant 0 : index
    %0 = vector.load %arg3[%c0, %c0_0] : memref<256x128xf32, #tpu.memory_space<vmem>>, vector<256x128xf32>
    %c0_1 = arith.constant 0 : index
    %c0_2 = arith.constant 0 : index
    %1 = vector.load %arg1[%c0_1, %c0_2] : memref<8x256xf32, #tpu.memory_space<vmem>>, vector<8x256xf32>
    %cst = arith.constant 1.000000e+04 : f32
    %2 = vector.broadcast %cst : f32 to vector<8x256xf32>
    %3 = arith.mulf %1, %2 : vector<8x256xf32>
    %cst_3 = arith.constant dense<0xFF800000> : vector<8xf32>
    %4 = vector.multi_reduction <maximumf>, %3, %cst_3 [1] : vector<8x256xf32> to vector<8xf32>
    %5 = vector.shape_cast %4 : vector<8xf32> to vector<8x1xf32>
    %6 = vector.broadcast %5 : vector<8x1xf32> to vector<8x256xf32>
    %7 = arith.subf %3, %6 : vector<8x256xf32>
    %8 = math.exp %7 : vector<8x256xf32>
    %cst_4 = arith.constant dense<0.000000e+00> : vector<8x128xf32>
    %9 = tpu.matmul %8, %0, %cst_4 {dimension_numbers = #tpu.dot_dimension_numbers<[1], [0], [0], [1], [0, 0, 1, 1], [], []>, precision = #tpu.contract_precision<fp32>} : vector<8x256xf32>, vector<256x128xf32>, vector<8x128xf32> -> vector<8x128xf32>
    %10 = vector.extract_strided_slice %9 {offsets = [0, 0], sizes = [8, 1], strides = [1, 1]} : vector<8x128xf32> to vector<8x1xf32>
    %cst_5 = arith.constant 1.000000e+00 : f32
    %11 = vector.broadcast %cst_5 : f32 to vector<8x1xf32>
    %12 = arith.divf %11, %10 : vector<8x1xf32>
    %13 = vector.extract_strided_slice %9 {offsets = [0, 1], sizes = [8, 1], strides = [1, 1]} : vector<8x128xf32> to vector<8x1xf32>
    %14 = arith.mulf %13, %12 : vector<8x1xf32>
    %cst_6 = arith.constant 8.000000e+00 : f32
    %15 = vector.broadcast %cst_6 : f32 to vector<8x1xf32>
    %16 = arith.subf %14, %15 : vector<8x1xf32>
    %17 = vector.extract_strided_slice %9 {offsets = [0, 2], sizes = [8, 1], strides = [1, 1]} : vector<8x128xf32> to vector<8x1xf32>
    %18 = arith.mulf %17, %12 : vector<8x1xf32>
    %cst_7 = arith.constant 8.000000e+00 : f32
    %19 = vector.broadcast %cst_7 : f32 to vector<8x1xf32>
    %20 = arith.subf %18, %19 : vector<8x1xf32>
    %c0_8 = arith.constant 0 : index
    %c0_9 = arith.constant 0 : index
    %21 = vector.load %arg2[%c0_8, %c0_9] : memref<8x256xf32, #tpu.memory_space<vmem>>, vector<8x256xf32>
    %cst_10 = arith.constant 1.000000e+04 : f32
    %22 = vector.broadcast %cst_10 : f32 to vector<8x256xf32>
    %23 = arith.mulf %21, %22 : vector<8x256xf32>
    %cst_11 = arith.constant dense<0xFF800000> : vector<8xf32>
    %24 = vector.multi_reduction <maximumf>, %23, %cst_11 [1] : vector<8x256xf32> to vector<8xf32>
    %25 = vector.shape_cast %24 : vector<8xf32> to vector<8x1xf32>
    %26 = vector.broadcast %25 : vector<8x1xf32> to vector<8x256xf32>
    %27 = arith.subf %23, %26 : vector<8x256xf32>
    %28 = math.exp %27 : vector<8x256xf32>
    %cst_12 = arith.constant dense<0.000000e+00> : vector<8x128xf32>
    %29 = tpu.matmul %28, %0, %cst_12 {dimension_numbers = #tpu.dot_dimension_numbers<[1], [0], [0], [1], [0, 0, 1, 1], [], []>, precision = #tpu.contract_precision<fp32>} : vector<8x256xf32>, vector<256x128xf32>, vector<8x128xf32> -> vector<8x128xf32>
    %30 = vector.extract_strided_slice %29 {offsets = [0, 0], sizes = [8, 1], strides = [1, 1]} : vector<8x128xf32> to vector<8x1xf32>
    %cst_13 = arith.constant 1.000000e+00 : f32
    %31 = vector.broadcast %cst_13 : f32 to vector<8x1xf32>
    %32 = arith.divf %31, %30 : vector<8x1xf32>
    %33 = vector.extract_strided_slice %29 {offsets = [0, 1], sizes = [8, 1], strides = [1, 1]} : vector<8x128xf32> to vector<8x1xf32>
    %34 = arith.mulf %33, %32 : vector<8x1xf32>
    %cst_14 = arith.constant 8.000000e+00 : f32
    %35 = vector.broadcast %cst_14 : f32 to vector<8x1xf32>
    %36 = arith.subf %34, %35 : vector<8x1xf32>
    %37 = vector.extract_strided_slice %29 {offsets = [0, 2], sizes = [8, 1], strides = [1, 1]} : vector<8x128xf32> to vector<8x1xf32>
    %38 = arith.mulf %37, %32 : vector<8x1xf32>
    %cst_15 = arith.constant 8.000000e+00 : f32
    %39 = vector.broadcast %cst_15 : f32 to vector<8x1xf32>
    %40 = arith.subf %38, %39 : vector<8x1xf32>
    %cst_16 = arith.constant 0.000000e+00 : f32
    %41 = vector.broadcast %cst_16 : f32 to vector<8x1xf32>
    %42 = arith.mulf %16, %41 : vector<8x1xf32>
    %cst_17 = arith.constant -1.800000e+03 : f32
    %43 = vector.broadcast %cst_17 : f32 to vector<8x1xf32>
    %44 = arith.addf %43, %42 : vector<8x1xf32>
    %cst_18 = arith.constant 1.000000e+00 : f32
    %45 = vector.broadcast %cst_18 : f32 to vector<8x1xf32>
    %46 = arith.mulf %16, %45 : vector<8x1xf32>
    %cst_19 = arith.constant -0.000000e+00 : f32
    %47 = vector.broadcast %cst_19 : f32 to vector<8x1xf32>
    %48 = arith.addf %47, %46 : vector<8x1xf32>
    %cst_20 = arith.constant 0.000000e+00 : f32
    %49 = vector.broadcast %cst_20 : f32 to vector<8x1xf32>
    %50 = arith.mulf %16, %49 : vector<8x1xf32>
    %cst_21 = arith.constant -0.000000e+00 : f32
    %51 = vector.broadcast %cst_21 : f32 to vector<8x1xf32>
    %52 = arith.addf %51, %50 : vector<8x1xf32>
    %cst_22 = arith.constant 0.000000e+00 : f32
    %53 = vector.broadcast %cst_22 : f32 to vector<8x1xf32>
    %54 = arith.mulf %20, %53 : vector<8x1xf32>
    %cst_23 = arith.constant 0.000000e+00 : f32
    %55 = vector.broadcast %cst_23 : f32 to vector<8x1xf32>
    %56 = arith.addf %55, %54 : vector<8x1xf32>
    %cst_24 = arith.constant 1.000000e+00 : f32
    %57 = vector.broadcast %cst_24 : f32 to vector<8x1xf32>
    %58 = arith.mulf %20, %57 : vector<8x1xf32>
    %cst_25 = arith.constant 0.000000e+00 : f32
    %59 = vector.broadcast %cst_25 : f32 to vector<8x1xf32>
    %60 = arith.addf %59, %58 : vector<8x1xf32>
    %cst_26 = arith.constant 0.000000e+00 : f32
    %61 = vector.broadcast %cst_26 : f32 to vector<8x1xf32>
    %62 = arith.mulf %20, %61 : vector<8x1xf32>
    %cst_27 = arith.constant 1.800000e+03 : f32
    %63 = vector.broadcast %cst_27 : f32 to vector<8x1xf32>
    %64 = arith.addf %63, %62 : vector<8x1xf32>
    %cst_28 = arith.constant 1.000000e+00 : f32
    %65 = vector.broadcast %cst_28 : f32 to vector<8x1xf32>
    %66 = arith.mulf %36, %65 : vector<8x1xf32>
    %cst_29 = arith.constant 0.000000e+00 : f32
    %67 = vector.broadcast %cst_29 : f32 to vector<8x1xf32>
    %68 = arith.addf %67, %66 : vector<8x1xf32>
    %cst_30 = arith.constant 0.000000e+00 : f32
    %69 = vector.broadcast %cst_30 : f32 to vector<8x1xf32>
    %70 = arith.mulf %36, %69 : vector<8x1xf32>
    %cst_31 = arith.constant 1.800000e+03 : f32
    %71 = vector.broadcast %cst_31 : f32 to vector<8x1xf32>
    %72 = arith.addf %71, %70 : vector<8x1xf32>
    %cst_32 = arith.constant 0.000000e+00 : f32
    %73 = vector.broadcast %cst_32 : f32 to vector<8x1xf32>
    %74 = arith.mulf %36, %73 : vector<8x1xf32>
    %cst_33 = arith.constant 0.000000e+00 : f32
    %75 = vector.broadcast %cst_33 : f32 to vector<8x1xf32>
    %76 = arith.addf %75, %74 : vector<8x1xf32>
    %cst_34 = arith.constant 1.000000e+00 : f32
    %77 = vector.broadcast %cst_34 : f32 to vector<8x1xf32>
    %78 = arith.mulf %40, %77 : vector<8x1xf32>
    %cst_35 = arith.constant 0.000000e+00 : f32
    %79 = vector.broadcast %cst_35 : f32 to vector<8x1xf32>
    %80 = arith.addf %79, %78 : vector<8x1xf32>
    %cst_36 = arith.constant 0.000000e+00 : f32
    %81 = vector.broadcast %cst_36 : f32 to vector<8x1xf32>
    %82 = arith.mulf %40, %81 : vector<8x1xf32>
    %cst_37 = arith.constant 0.000000e+00 : f32
    %83 = vector.broadcast %cst_37 : f32 to vector<8x1xf32>
    %84 = arith.addf %83, %82 : vector<8x1xf32>
    %cst_38 = arith.constant 0.000000e+00 : f32
    %85 = vector.broadcast %cst_38 : f32 to vector<8x1xf32>
    %86 = arith.mulf %40, %85 : vector<8x1xf32>
    %cst_39 = arith.constant 1.800000e+03 : f32
    %87 = vector.broadcast %cst_39 : f32 to vector<8x1xf32>
    %88 = arith.addf %87, %86 : vector<8x1xf32>
    %cst_40 = arith.constant -9.000000e+02 : f32
    %89 = vector.broadcast %cst_40 : f32 to vector<8x1xf32>
    %90 = arith.mulf %89, %16 : vector<8x1xf32>
    %cst_41 = arith.constant 7.000000e+02 : f32
    %91 = vector.broadcast %cst_41 : f32 to vector<8x1xf32>
    %92 = arith.mulf %16, %91 : vector<8x1xf32>
    %cst_42 = arith.constant -0.000000e+00 : f32
    %93 = vector.broadcast %cst_42 : f32 to vector<8x1xf32>
    %94 = arith.addf %93, %92 : vector<8x1xf32>
    %95 = arith.subf %90, %94 : vector<8x1xf32>
    %cst_43 = arith.constant -9.000000e+02 : f32
    %96 = vector.broadcast %cst_43 : f32 to vector<8x1xf32>
    %97 = arith.mulf %96, %20 : vector<8x1xf32>
    %cst_44 = arith.constant 7.000000e+02 : f32
    %98 = vector.broadcast %cst_44 : f32 to vector<8x1xf32>
    %99 = arith.mulf %20, %98 : vector<8x1xf32>
    %cst_45 = arith.constant 0.000000e+00 : f32
    %100 = vector.broadcast %cst_45 : f32 to vector<8x1xf32>
    %101 = arith.addf %100, %99 : vector<8x1xf32>
    %102 = arith.subf %97, %101 : vector<8x1xf32>
    %cst_46 = arith.constant -9.000000e+02 : f32
    %103 = vector.broadcast %cst_46 : f32 to vector<8x1xf32>
    %104 = arith.mulf %103, %36 : vector<8x1xf32>
    %cst_47 = arith.constant 7.000000e+02 : f32
    %105 = vector.broadcast %cst_47 : f32 to vector<8x1xf32>
    %106 = arith.mulf %36, %105 : vector<8x1xf32>
    %cst_48 = arith.constant 0.000000e+00 : f32
    %107 = vector.broadcast %cst_48 : f32 to vector<8x1xf32>
    %108 = arith.addf %107, %106 : vector<8x1xf32>
    %109 = arith.subf %104, %108 : vector<8x1xf32>
    %cst_49 = arith.constant -9.000000e+02 : f32
    %110 = vector.broadcast %cst_49 : f32 to vector<8x1xf32>
    %111 = arith.mulf %110, %40 : vector<8x1xf32>
    %cst_50 = arith.constant 7.000000e+02 : f32
    %112 = vector.broadcast %cst_50 : f32 to vector<8x1xf32>
    %113 = arith.mulf %40, %112 : vector<8x1xf32>
    %cst_51 = arith.constant 0.000000e+00 : f32
    %114 = vector.broadcast %cst_51 : f32 to vector<8x1xf32>
    %115 = arith.addf %114, %113 : vector<8x1xf32>
    %116 = arith.subf %111, %115 : vector<8x1xf32>
    %117 = arith.mulf %44, %44 : vector<8x1xf32>
    %cst_52 = arith.constant 0.000000e+00 : f32
    %118 = vector.broadcast %cst_52 : f32 to vector<8x1xf32>
    %119 = arith.addf %118, %117 : vector<8x1xf32>
    %120 = arith.mulf %56, %56 : vector<8x1xf32>
    %121 = arith.addf %119, %120 : vector<8x1xf32>
    %122 = arith.mulf %68, %68 : vector<8x1xf32>
    %123 = arith.addf %121, %122 : vector<8x1xf32>
    %124 = arith.mulf %80, %80 : vector<8x1xf32>
    %125 = arith.addf %123, %124 : vector<8x1xf32>
    %126 = arith.mulf %44, %48 : vector<8x1xf32>
    %cst_53 = arith.constant 0.000000e+00 : f32
    %127 = vector.broadcast %cst_53 : f32 to vector<8x1xf32>
    %128 = arith.addf %127, %126 : vector<8x1xf32>
    %129 = arith.mulf %56, %60 : vector<8x1xf32>
    %130 = arith.addf %128, %129 : vector<8x1xf32>
    %131 = arith.mulf %68, %72 : vector<8x1xf32>
    %132 = arith.addf %130, %131 : vector<8x1xf32>
    %133 = arith.mulf %80, %84 : vector<8x1xf32>
    %134 = arith.addf %132, %133 : vector<8x1xf32>
    %135 = arith.mulf %44, %52 : vector<8x1xf32>
    %cst_54 = arith.constant 0.000000e+00 : f32
    %136 = vector.broadcast %cst_54 : f32 to vector<8x1xf32>
    %137 = arith.addf %136, %135 : vector<8x1xf32>
    %138 = arith.mulf %56, %64 : vector<8x1xf32>
    %139 = arith.addf %137, %138 : vector<8x1xf32>
    %140 = arith.mulf %68, %76 : vector<8x1xf32>
    %141 = arith.addf %139, %140 : vector<8x1xf32>
    %142 = arith.mulf %80, %88 : vector<8x1xf32>
    %143 = arith.addf %141, %142 : vector<8x1xf32>
    %144 = arith.mulf %48, %44 : vector<8x1xf32>
    %cst_55 = arith.constant 0.000000e+00 : f32
    %145 = vector.broadcast %cst_55 : f32 to vector<8x1xf32>
    %146 = arith.addf %145, %144 : vector<8x1xf32>
    %147 = arith.mulf %60, %56 : vector<8x1xf32>
    %148 = arith.addf %146, %147 : vector<8x1xf32>
    %149 = arith.mulf %72, %68 : vector<8x1xf32>
    %150 = arith.addf %148, %149 : vector<8x1xf32>
    %151 = arith.mulf %84, %80 : vector<8x1xf32>
    %152 = arith.addf %150, %151 : vector<8x1xf32>
    %153 = arith.mulf %48, %48 : vector<8x1xf32>
    %cst_56 = arith.constant 0.000000e+00 : f32
    %154 = vector.broadcast %cst_56 : f32 to vector<8x1xf32>
    %155 = arith.addf %154, %153 : vector<8x1xf32>
    %156 = arith.mulf %60, %60 : vector<8x1xf32>
    %157 = arith.addf %155, %156 : vector<8x1xf32>
    %158 = arith.mulf %72, %72 : vector<8x1xf32>
    %159 = arith.addf %157, %158 : vector<8x1xf32>
    %160 = arith.mulf %84, %84 : vector<8x1xf32>
    %161 = arith.addf %159, %160 : vector<8x1xf32>
    %162 = arith.mulf %48, %52 : vector<8x1xf32>
    %cst_57 = arith.constant 0.000000e+00 : f32
    %163 = vector.broadcast %cst_57 : f32 to vector<8x1xf32>
    %164 = arith.addf %163, %162 : vector<8x1xf32>
    %165 = arith.mulf %60, %64 : vector<8x1xf32>
    %166 = arith.addf %164, %165 : vector<8x1xf32>
    %167 = arith.mulf %72, %76 : vector<8x1xf32>
    %168 = arith.addf %166, %167 : vector<8x1xf32>
    %169 = arith.mulf %84, %88 : vector<8x1xf32>
    %170 = arith.addf %168, %169 : vector<8x1xf32>
    %171 = arith.mulf %52, %44 : vector<8x1xf32>
    %cst_58 = arith.constant 0.000000e+00 : f32
    %172 = vector.broadcast %cst_58 : f32 to vector<8x1xf32>
    %173 = arith.addf %172, %171 : vector<8x1xf32>
    %174 = arith.mulf %64, %56 : vector<8x1xf32>
    %175 = arith.addf %173, %174 : vector<8x1xf32>
    %176 = arith.mulf %76, %68 : vector<8x1xf32>
    %177 = arith.addf %175, %176 : vector<8x1xf32>
    %178 = arith.mulf %88, %80 : vector<8x1xf32>
    %179 = arith.addf %177, %178 : vector<8x1xf32>
    %180 = arith.mulf %52, %48 : vector<8x1xf32>
    %cst_59 = arith.constant 0.000000e+00 : f32
    %181 = vector.broadcast %cst_59 : f32 to vector<8x1xf32>
    %182 = arith.addf %181, %180 : vector<8x1xf32>
    %183 = arith.mulf %64, %60 : vector<8x1xf32>
    %184 = arith.addf %182, %183 : vector<8x1xf32>
    %185 = arith.mulf %76, %72 : vector<8x1xf32>
    %186 = arith.addf %184, %185 : vector<8x1xf32>
    %187 = arith.mulf %88, %84 : vector<8x1xf32>
    %188 = arith.addf %186, %187 : vector<8x1xf32>
    %189 = arith.mulf %52, %52 : vector<8x1xf32>
    %cst_60 = arith.constant 0.000000e+00 : f32
    %190 = vector.broadcast %cst_60 : f32 to vector<8x1xf32>
    %191 = arith.addf %190, %189 : vector<8x1xf32>
    %192 = arith.mulf %64, %64 : vector<8x1xf32>
    %193 = arith.addf %191, %192 : vector<8x1xf32>
    %194 = arith.mulf %76, %76 : vector<8x1xf32>
    %195 = arith.addf %193, %194 : vector<8x1xf32>
    %196 = arith.mulf %88, %88 : vector<8x1xf32>
    %197 = arith.addf %195, %196 : vector<8x1xf32>
    %198 = arith.mulf %44, %95 : vector<8x1xf32>
    %cst_61 = arith.constant 0.000000e+00 : f32
    %199 = vector.broadcast %cst_61 : f32 to vector<8x1xf32>
    %200 = arith.addf %199, %198 : vector<8x1xf32>
    %201 = arith.mulf %56, %102 : vector<8x1xf32>
    %202 = arith.addf %200, %201 : vector<8x1xf32>
    %203 = arith.mulf %68, %109 : vector<8x1xf32>
    %204 = arith.addf %202, %203 : vector<8x1xf32>
    %205 = arith.mulf %80, %116 : vector<8x1xf32>
    %206 = arith.addf %204, %205 : vector<8x1xf32>
    %207 = arith.mulf %48, %95 : vector<8x1xf32>
    %cst_62 = arith.constant 0.000000e+00 : f32
    %208 = vector.broadcast %cst_62 : f32 to vector<8x1xf32>
    %209 = arith.addf %208, %207 : vector<8x1xf32>
    %210 = arith.mulf %60, %102 : vector<8x1xf32>
    %211 = arith.addf %209, %210 : vector<8x1xf32>
    %212 = arith.mulf %72, %109 : vector<8x1xf32>
    %213 = arith.addf %211, %212 : vector<8x1xf32>
    %214 = arith.mulf %84, %116 : vector<8x1xf32>
    %215 = arith.addf %213, %214 : vector<8x1xf32>
    %216 = arith.mulf %52, %95 : vector<8x1xf32>
    %cst_63 = arith.constant 0.000000e+00 : f32
    %217 = vector.broadcast %cst_63 : f32 to vector<8x1xf32>
    %218 = arith.addf %217, %216 : vector<8x1xf32>
    %219 = arith.mulf %64, %102 : vector<8x1xf32>
    %220 = arith.addf %218, %219 : vector<8x1xf32>
    %221 = arith.mulf %76, %109 : vector<8x1xf32>
    %222 = arith.addf %220, %221 : vector<8x1xf32>
    %223 = arith.mulf %88, %116 : vector<8x1xf32>
    %224 = arith.addf %222, %223 : vector<8x1xf32>
    %225 = arith.mulf %161, %197 : vector<8x1xf32>
    %226 = arith.mulf %170, %188 : vector<8x1xf32>
    %227 = arith.subf %225, %226 : vector<8x1xf32>
    %228 = arith.mulf %125, %227 : vector<8x1xf32>
    %229 = arith.mulf %152, %197 : vector<8x1xf32>
    %230 = arith.mulf %170, %179 : vector<8x1xf32>
    %231 = arith.subf %229, %230 : vector<8x1xf32>
    %232 = arith.mulf %134, %231 : vector<8x1xf32>
    %233 = arith.subf %228, %232 : vector<8x1xf32>
    %234 = arith.mulf %152, %188 : vector<8x1xf32>
    %235 = arith.mulf %161, %179 : vector<8x1xf32>
    %236 = arith.subf %234, %235 : vector<8x1xf32>
    %237 = arith.mulf %143, %236 : vector<8x1xf32>
    %238 = arith.addf %233, %237 : vector<8x1xf32>
    %239 = math.absf %238 : vector<8x1xf32>
    %cst_64 = arith.constant 9.99999968E-21 : f32
    %240 = vector.broadcast %cst_64 : f32 to vector<8x1xf32>
    %241 = arith.cmpf olt, %239, %240 : vector<8x1xf32>
    %cst_65 = arith.constant 0.000000e+00 : f32
    %242 = vector.broadcast %cst_65 : f32 to vector<8x1xf32>
    %243 = arith.cmpf olt, %238, %242 : vector<8x1xf32>
    %cst_66 = arith.constant 0.000000e+00 : f32
    %cst_67 = arith.constant 9.99999968E-21 : f32
    %244 = arith.subf %cst_66, %cst_67 : f32
    %cst_68 = arith.constant 9.99999968E-21 : f32
    %245 = vector.broadcast %244 : f32 to vector<8x1xf32>
    %246 = vector.broadcast %cst_68 : f32 to vector<8x1xf32>
    %247 = arith.select %243, %245, %246 : vector<8x1xi1>, vector<8x1xf32>
    %248 = arith.select %241, %247, %238 : vector<8x1xi1>, vector<8x1xf32>
    %cst_69 = arith.constant 1.000000e+00 : f32
    %249 = vector.broadcast %cst_69 : f32 to vector<8x1xf32>
    %250 = arith.divf %249, %248 : vector<8x1xf32>
    %251 = arith.mulf %161, %197 : vector<8x1xf32>
    %252 = arith.mulf %170, %188 : vector<8x1xf32>
    %253 = arith.subf %251, %252 : vector<8x1xf32>
    %254 = arith.mulf %206, %253 : vector<8x1xf32>
    %255 = arith.mulf %215, %197 : vector<8x1xf32>
    %256 = arith.mulf %170, %224 : vector<8x1xf32>
    %257 = arith.subf %255, %256 : vector<8x1xf32>
    %258 = arith.mulf %134, %257 : vector<8x1xf32>
    %259 = arith.subf %254, %258 : vector<8x1xf32>
    %260 = arith.mulf %215, %188 : vector<8x1xf32>
    %261 = arith.mulf %161, %224 : vector<8x1xf32>
    %262 = arith.subf %260, %261 : vector<8x1xf32>
    %263 = arith.mulf %143, %262 : vector<8x1xf32>
    %264 = arith.addf %259, %263 : vector<8x1xf32>
    %265 = arith.mulf %264, %250 : vector<8x1xf32>
    %cst_70 = arith.constant 1.275000e+02 : f32
    %266 = vector.broadcast %cst_70 : f32 to vector<8x1xf32>
    %267 = arith.addf %265, %266 : vector<8x1xf32>
    %268 = arith.mulf %215, %197 : vector<8x1xf32>
    %269 = arith.mulf %170, %224 : vector<8x1xf32>
    %270 = arith.subf %268, %269 : vector<8x1xf32>
    %271 = arith.mulf %125, %270 : vector<8x1xf32>
    %272 = arith.mulf %152, %197 : vector<8x1xf32>
    %273 = arith.mulf %170, %179 : vector<8x1xf32>
    %274 = arith.subf %272, %273 : vector<8x1xf32>
    %275 = arith.mulf %206, %274 : vector<8x1xf32>
    %276 = arith.subf %271, %275 : vector<8x1xf32>
    %277 = arith.mulf %152, %224 : vector<8x1xf32>
    %278 = arith.mulf %215, %179 : vector<8x1xf32>
    %279 = arith.subf %277, %278 : vector<8x1xf32>
    %280 = arith.mulf %143, %279 : vector<8x1xf32>
    %281 = arith.addf %276, %280 : vector<8x1xf32>
    %282 = arith.mulf %281, %250 : vector<8x1xf32>
    %cst_71 = arith.constant 1.275000e+02 : f32
    %283 = vector.broadcast %cst_71 : f32 to vector<8x1xf32>
    %284 = arith.addf %282, %283 : vector<8x1xf32>
    %285 = arith.mulf %161, %224 : vector<8x1xf32>
    %286 = arith.mulf %215, %188 : vector<8x1xf32>
    %287 = arith.subf %285, %286 : vector<8x1xf32>
    %288 = arith.mulf %125, %287 : vector<8x1xf32>
    %289 = arith.mulf %152, %224 : vector<8x1xf32>
    %290 = arith.mulf %215, %179 : vector<8x1xf32>
    %291 = arith.subf %289, %290 : vector<8x1xf32>
    %292 = arith.mulf %134, %291 : vector<8x1xf32>
    %293 = arith.subf %288, %292 : vector<8x1xf32>
    %294 = arith.mulf %152, %188 : vector<8x1xf32>
    %295 = arith.mulf %161, %179 : vector<8x1xf32>
    %296 = arith.subf %294, %295 : vector<8x1xf32>
    %297 = arith.mulf %206, %296 : vector<8x1xf32>
    %298 = arith.addf %293, %297 : vector<8x1xf32>
    %299 = arith.mulf %298, %250 : vector<8x1xf32>
    %cst_72 = arith.constant 1.275000e+02 : f32
    %300 = vector.broadcast %cst_72 : f32 to vector<8x1xf32>
    %301 = arith.addf %299, %300 : vector<8x1xf32>
    %302 = tpu.iota {dimensions = array<i32: 1>} : vector<8x128xi32>
    %c0_i32 = arith.constant 0 : i32
    %303 = vector.broadcast %c0_i32 : i32 to vector<8x128xi32>
    %304 = arith.cmpi eq, %302, %303 : vector<8x128xi32>
    %cst_73 = arith.constant 0.000000e+00 : f32
    %305 = vector.shape_cast %267 : vector<8x1xf32> to vector<8x1xf32>
    %306 = vector.broadcast %305 : vector<8x1xf32> to vector<8x128xf32>
    %307 = vector.broadcast %cst_73 : f32 to vector<8x128xf32>
    %308 = arith.select %304, %306, %307 : vector<8x128xi1>, vector<8x128xf32>
    %c1_i32 = arith.constant 1 : i32
    %309 = vector.broadcast %c1_i32 : i32 to vector<8x128xi32>
    %310 = arith.cmpi eq, %302, %309 : vector<8x128xi32>
    %cst_74 = arith.constant 0.000000e+00 : f32
    %311 = vector.shape_cast %284 : vector<8x1xf32> to vector<8x1xf32>
    %312 = vector.broadcast %311 : vector<8x1xf32> to vector<8x128xf32>
    %313 = vector.broadcast %cst_74 : f32 to vector<8x128xf32>
    %314 = arith.select %310, %312, %313 : vector<8x128xi1>, vector<8x128xf32>
    %315 = arith.addf %308, %314 : vector<8x128xf32>
    %c2_i32 = arith.constant 2 : i32
    %316 = vector.broadcast %c2_i32 : i32 to vector<8x128xi32>
    %317 = arith.cmpi eq, %302, %316 : vector<8x128xi32>
    %cst_75 = arith.constant 0.000000e+00 : f32
    %318 = vector.shape_cast %301 : vector<8x1xf32> to vector<8x1xf32>
    %319 = vector.broadcast %318 : vector<8x1xf32> to vector<8x128xf32>
    %320 = vector.broadcast %cst_75 : f32 to vector<8x128xf32>
    %321 = arith.select %317, %319, %320 : vector<8x128xi1>, vector<8x128xf32>
    %322 = arith.addf %315, %321 : vector<8x128xf32>
    %c0_76 = arith.constant 0 : index
    %c0_77 = arith.constant 0 : index
    %323 = vector.load %arg4[%c0_76, %c0_77] : memref<8x128xf32, #tpu.memory_space<vmem>>, vector<8x128xf32>
    tpu.vector_store %arg4[%c0_76, %c0_77], %322 {strides = array<i32>} : memref<8x128xf32, #tpu.memory_space<vmem>>, vector<8x128xf32>,
    return
  }
  func.func @transform_0(%arg0: i32) -> (i32, i32) {
    %c0_i32 = arith.constant 0 : i32
    %c0_i32_0 = arith.constant 0 : i32
    return %arg0, %c0_i32 : i32, i32
  }
  func.func @transform_1(%arg0: i32) -> (i32, i32) {
    %c0_i32 = arith.constant 0 : i32
    %c0_i32_0 = arith.constant 0 : i32
    return %arg0, %c0_i32 : i32, i32
  }
  func.func @transform_2(%arg0: i32) -> (i32, i32) {
    %c0_i32 = arith.constant 0 : i32
    %c0_i32_0 = arith.constant 0 : i32
    %c0_i32_1 = arith.constant 0 : i32
    return %c0_i32, %c0_i32_0 : i32, i32
  }
  func.func @transform_3(%arg0: i32) -> (i32, i32) {
    %c0_i32 = arith.constant 0 : i32
    %c0_i32_0 = arith.constant 0 : i32
    return %arg0, %c0_i32 : i32, i32
  }
}

</mosaic_0001>

<llo_original>
// kernel: tpu_custom_call.1
$region0: #{tpu_custom_call.1}
  #allocation0 [shape = 'u32[]', space=smem, size = 0x4, offset = 0x4, fixed_abs, tag = 'smem constant byte address 0x4 - core index']
  #allocation1 [shape = 'u32[144,128]{1,0:T(1,128)}', space=vmem, size = 0x12000, scoped, tag = 'internal scratch']
  %s0 = inlined_call_operand.hbm [shape: f32[8,256], index: 0, kind: input, shape index: {}]
  %s1 = inlined_call_operand.hbm [shape: f32[8,256], index: 1, kind: input, shape index: {}]
  %s2 = inlined_call_operand.hbm [shape: f32[256,128], index: 2, kind: input, shape index: {}]
  %s3 = inlined_call_operand.hbm [shape: f32[8,128], index: 3, kind: output, shape index: {}]
  %s4 = sld [smem:[#allocation0]]
  $region34: #{tpu_custom_call.1} parent=0
    _
  %s6 = ssub.s32 1, %s4
  %s7 = scalar_select 0, %s6, %s4
  $region1: #{tpu_custom_call.1} parent=0
    #allocation2 [shape = 'u8[8192]{0}', space=vmem, size = 0x2000, scoped, tag = 'input window, operand 0, single buffered']
    #allocation3 [shape = 's32[1]{0}', space=sflag, size = 0x4, scoped, tag = 'scoped memory for tpu_custom_call.1']
    #allocation4 [shape = 's32[1]{0}', space=sflag, size = 0x4, scoped, tag = 'scoped memory for tpu_custom_call.1']
    #allocation5 [shape = 'u8[8192]{0}', space=vmem, size = 0x2000, scoped, tag = 'input window, operand 1, single buffered']
    #allocation6 [shape = 's32[1]{0}', space=sflag, size = 0x4, scoped, tag = 'scoped memory for tpu_custom_call.1']
    #allocation7 [shape = 'u8[131072]{0}', space=vmem, size = 0x20000, scoped, tag = 'input window, operand 2, single buffered']
    #allocation8 [shape = 'u8[4096]{0}', space=vmem, size = 0x1000, scoped, tag = 'output window, operand 0, single buffered']
    %8 = vsyncpa [#allocation3], 0
    %9 = vsyncpa [#allocation6], 0
    %10 = vsyncpa [#allocation4], 0
    // Predicated region
    $region2: #{tpu_custom_call.1} parent=1 // pred_check
      _
    $region3: #{tpu_custom_call.1} parent=1 // pred_check_branch
      %12 = sbr.rel (0) target = $region5
    $region4: #{tpu_custom_call.1} parent=1 // pred_region
      %s14 = ssub.s32 256, 256
      %15 = vsyncadd [#allocation3], %s14
      %s17 = sshll.u32 [#allocation2], 4
      %s18 = int_to_ptr.vmem [resolvable:$true] %s17
      %20 = dma.hbm_to_vmem [thread:$0]  %s0, 256, %s18, [#allocation3]
    $region5: #{tpu_custom_call.1} parent=1 // pred_fallthru
      _
    // Predicated region
    $region6: #{tpu_custom_call.1} parent=1 // pred_check
      _
    $region7: #{tpu_custom_call.1} parent=1 // pred_check_branch
      %22 = sbr.rel (0) target = $region9
    $region8: #{tpu_custom_call.1} parent=1 // pred_region
      %s24 = ssub.s32 256, 256
      %25 = vsyncadd [#allocation6], %s24
      %s27 = sshll.u32 [#allocation5], 4
      %s28 = int_to_ptr.vmem [resolvable:$true] %s27
      %30 = dma.hbm_to_vmem [thread:$0]  %s1, 256, %s28, [#allocation6]
    $region9: #{tpu_custom_call.1} parent=1 // pred_fallthru
      _
    // Predicated region
    $region10: #{tpu_custom_call.1} parent=1 // pred_check
      _
    $region11: #{tpu_custom_call.1} parent=1 // pred_check_branch
      %32 = sbr.rel (0) target = $region13
    $region12: #{tpu_custom_call.1} parent=1 // pred_region
      %s34 = ssub.s32 4096, 4096
      %35 = vsyncadd [#allocation6], %s34
      %s36 = sshll.u32 [#allocation7], 4
      %s37 = int_to_ptr.vmem [resolvable:$true] %s36
      %42 = dma.hbm_to_vmem [thread:$0]  %s2, 4096, %s37, [#allocation6], 128, 128, 8
    $region13: #{tpu_custom_call.1} parent=1 // pred_fallthru
      _
    // Predicated region
    $region14: #{tpu_custom_call.1} parent=1 // pred_check
      _
    $region15: #{tpu_custom_call.1} parent=1 // pred_check_branch
      %44 = sbr.rel (0) target = $region17
    $region16: #{tpu_custom_call.1} parent=1 // pred_region
      %45 = dma.done [#allocation3], 256
    $region17: #{tpu_custom_call.1} parent=1 // pred_fallthru
      _
    // Predicated region
    $region18: #{tpu_custom_call.1} parent=1 // pred_check
      _
    $region19: #{tpu_custom_call.1} parent=1 // pred_check_branch
      %47 = sbr.rel (0) target = $region21
    $region20: #{tpu_custom_call.1} parent=1 // pred_region
      %48 = dma.done [#allocation6], 256
    $region21: #{tpu_custom_call.1} parent=1 // pred_fallthru
      _
    // Predicated region
    $region22: #{tpu_custom_call.1} parent=1 // pred_check
      _
    $region23: #{tpu_custom_call.1} parent=1 // pred_check_branch
      %50 = sbr.rel (0) target = $region25
    $region24: #{tpu_custom_call.1} parent=1 // pred_region
      %51 = dma.done [#allocation6], 4096
    $region25: #{tpu_custom_call.1} parent=1 // pred_fallthru
      _
    %v52 = vld [vmem:[#allocation7] sm:$0xff]
    %v53 = vld [vmem:[#allocation7 + $0x8] sm:$0xff]
    %v54 = vld [vmem:[#allocation7 + $0x10] sm:$0xff]
    %v55 = vld [vmem:[#allocation7 + $0x18] sm:$0xff]
    %v56 = vld [vmem:[#allocation7 + $0x20] sm:$0xff]
    %v57 = vld [vmem:[#allocation7 + $0x28] sm:$0xff]
    %v58 = vld [vmem:[#allocation7 + $0x30] sm:$0xff]
    %v59 = vld [vmem:[#allocation7 + $0x38] sm:$0xff]
    %v60 = vld [vmem:[#allocation7 + $0x40] sm:$0xff]
    %v61 = vld [vmem:[#allocation7 + $0x48] sm:$0xff]
    %v62 = vld [vmem:[#allocation7 + $0x50] sm:$0xff]
    %v63 = vld [vmem:[#allocation7 + $0x58] sm:$0xff]
    %v64 = vld [vmem:[#allocation7 + $0x60] sm:$0xff]
    %v65 = vld [vmem:[#allocation7 + $0x68] sm:$0xff]
    %v66 = vld [vmem:[#allocation7 + $0x70] sm:$0xff]
    %v67 = vld [vmem:[#allocation7 + $0x78] sm:$0xff]
    %v68 = vld [vmem:[#allocation7 + $0x80] sm:$0xff]
    %v69 = vld [vmem:[#allocation7 + $0x88] sm:$0xff]
    %v70 = vld [vmem:[#allocation7 + $0x90] sm:$0xff]
    %v71 = vld [vmem:[#allocation7 + $0x98] sm:$0xff]
    %v72 = vld [vmem:[#allocation7 + $0xa0] sm:$0xff]
    %v73 = vld [vmem:[#allocation7 + $0xa8] sm:$0xff]
    %v74 = vld [vmem:[#allocation7 + $0xb0] sm:$0xff]
    %v75 = vld [vmem:[#allocation7 + $0xb8] sm:$0xff]
    %v76 = vld [vmem:[#allocation7 + $0xc0] sm:$0xff]
    %v77 = vld [vmem:[#allocation7 + $0xc8] sm:$0xff]
    %v78 = vld [vmem:[#allocation7 + $0xd0] sm:$0xff]
    %v79 = vld [vmem:[#allocation7 + $0xd8] sm:$0xff]
    %v80 = vld [vmem:[#allocation7 + $0xe0] sm:$0xff]
    %v81 = vld [vmem:[#allocation7 + $0xe8] sm:$0xff]
    %v82 = vld [vmem:[#allocation7 + $0xf0] sm:$0xff]
    %v83 = vld [vmem:[#allocation7 + $0xf8] sm:$0xff]
    %v84 = vld [vmem:[#allocation2] sm:$0xff]
    %v85 = vld [vmem:[#allocation2 + $0x8] sm:$0xff]
    %v86 = vmul.f32 %v84, 10000.0
    %v87 = vmul.f32 %v85, 10000.0
    %v88 = vmax.f32 %v86, %v87
    %89 = vmax.xlane.f32.xlu0 %v88
    %v90 = vpop.xlane.xlu0 %89
    %v91 = vsub.f32 %v86, %v90
    %v92 = vsub.f32 %v87, %v90
    %v93 = vmul.f32 %v91, 1.442695
    %v94 = vpow.pop %v93
    %v95 = vmul.f32 %v92, 1.442695
    %v96 = vpow.pop %v95
    %97 = vmatprep.subr.mxu0 0.0
    %v98 = vand.u32 %v52, 4294901760
    %99 = vmatpush1.msra.mxu0 %v98
    %100 = vmatprep.subr.mxu0 0.0
    %v101 = vand.u32 %v53, 4294901760
    %102 = vmatpush1.msra.mxu0 %v101
    %103 = vmatprep.subr.mxu0 0.0
    %v104 = vand.u32 %v54, 4294901760
    %105 = vmatpush1.msra.mxu0 %v104
    %106 = vmatprep.subr.mxu0 0.0
    %v107 = vand.u32 %v55, 4294901760
    %108 = vmatpush1.msra.mxu0 %v107
    %109 = vmatprep.subr.mxu0 0.0
    %v110 = vand.u32 %v56, 4294901760
    %111 = vmatpush1.msra.mxu0 %v110
    %112 = vmatprep.subr.mxu0 0.0
    %v113 = vand.u32 %v57, 4294901760
    %114 = vmatpush1.msra.mxu0 %v113
    %115 = vmatprep.subr.mxu0 0.0
    %v116 = vand.u32 %v58, 4294901760
    %117 = vmatpush1.msra.mxu0 %v116
    %118 = vmatprep.subr.mxu0 0.0
    %v119 = vand.u32 %v59, 4294901760
    %120 = vmatpush1.msra.mxu0 %v119
    %121 = vmatprep.subr.mxu0 0.0
    %v122 = vand.u32 %v60, 4294901760
    %123 = vmatpush1.msra.mxu0 %v122
    %124 = vmatprep.subr.mxu0 0.0
    %v125 = vand.u32 %v61, 4294901760
    %126 = vmatpush1.msra.mxu0 %v125
    %127 = vmatprep.subr.mxu0 0.0
    %v128 = vand.u32 %v62, 4294901760
    %129 = vmatpush1.msra.mxu0 %v128
    %130 = vmatprep.subr.mxu0 0.0
    %v131 = vand.u32 %v63, 4294901760
    %132 = vmatpush1.msra.mxu0 %v131
    %133 = vmatprep.subr.mxu0 0.0
    %v134 = vand.u32 %v64, 4294901760
    %135 = vmatpush1.msra.mxu0 %v134
    %136 = vmatprep.subr.mxu0 0.0
    %v137 = vand.u32 %v65, 4294901760
    %138 = vmatpush1.msra.mxu0 %v137
    %139 = vmatprep.subr.mxu0 0.0
    %v140 = vand.u32 %v66, 4294901760
    %141 = vmatpush1.msra.mxu0 %v140
    %142 = vmatprep.subr.mxu0 0.0
    %v143 = vand.u32 %v67, 4294901760
    %144 = vmatpush1.msra.mxu0 %v143
    %145 = vmatprep.subr.mxu0 0.0
    %v146 = vand.u32 %v68, 4294901760
    %147 = vmatpush1.msra.mxu0 %v146
    %148 = vmatprep.subr.mxu0 0.0
    %v149 = vand.u32 %v69, 4294901760
    %150 = vmatpush1.msra.mxu0 %v149
    %151 = vmatprep.subr.mxu0 0.0
    %v152 = vand.u32 %v70, 4294901760
    %153 = vmatpush1.msra.mxu0 %v152
    %154 = vmatprep.subr.mxu0 0.0
    %v155 = vand.u32 %v71, 4294901760
    %156 = vmatpush1.msra.mxu0 %v155
    %157 = vmatprep.subr.mxu0 0.0
    %v158 = vand.u32 %v72, 4294901760
    %159 = vmatpush1.msra.mxu0 %v158
    %160 = vmatprep.subr.mxu0 0.0
    %v161 = vand.u32 %v73, 4294901760
    %162 = vmatpush1.msra.mxu0 %v161
    %163 = vmatprep.subr.mxu0 0.0
    %v164 = vand.u32 %v74, 4294901760
    %165 = vmatpush1.msra.mxu0 %v164
    %166 = vmatprep.subr.mxu0 0.0
    %v167 = vand.u32 %v75, 4294901760
    %168 = vmatpush1.msra.mxu0 %v167
    %169 = vmatprep.subr.mxu0 0.0
    %v170 = vand.u32 %v76, 4294901760
    %171 = vmatpush1.msra.mxu0 %v170
    %172 = vmatprep.subr.mxu0 0.0
    %v173 = vand.u32 %v77, 4294901760
    %174 = vmatpush1.msra.mxu0 %v173
    %175 = vmatprep.subr.mxu0 0.0
    %v176 = vand.u32 %v78, 4294901760
    %177 = vmatpush1.msra.mxu0 %v176
    %178 = vmatprep.subr.mxu0 0.0
    %v179 = vand.u32 %v79, 4294901760
    %180 = vmatpush1.msra.mxu0 %v179
    %181 = vmatprep.subr.mxu0 0.0
    %v182 = vand.u32 %v80, 4294901760
    %183 = vmatpush1.msra.mxu0 %v182
    %184 = vmatprep.subr.mxu0 0.0
    %v185 = vand.u32 %v81, 4294901760
    %186 = vmatpush1.msra.mxu0 %v185
    %187 = vmatprep.subr.mxu0 0.0
    %v188 = vand.u32 %v82, 4294901760
    %189 = vmatpush1.msra.mxu0 %v188
    %190 = vmatprep.subr.mxu0 0.0
    %v191 = vand.u32 %v83, 4294901760
    %192 = vmatpush1.msra.mxu0 %v191
    %v193 = vand.u32 %v96, 4294901760
    %v194 = vsub.f32 %v96, %v193
    %v195 = vand.u32 %v194, 4294901760
    %v196 = vsub.f32 %v194, %v195
    %v197 = vand.u32 %v196, 4294901760
    %198 = vmatprep.mubr.f32.mxu0 %v197
    %v199 = vand.u32 %v94, 4294901760
    %v200 = vsub.f32 %v94, %v199
    %v201 = vand.u32 %v200, 4294901760
    %v202 = vsub.f32 %v200, %v201
    %v203 = vand.u32 %v202, 4294901760
    %204 = vmatmul.mubr.f32.gmra.mrb[0].mxu0 %v203
    %v205 = vpop.f32.mrb[0].mxu0
    %v206 = vadd.f32 0.0, %v205
    %v207 = vpop.f32.mrb[0].mxu0
    %208 = vdwg.mxu0
    %209 = vmatprep.subr.mxu0 0.0
    %v210 = vand.u32 %v52, 4294901760
    %v211 = vsub.f32 %v52, %v210
    %v212 = vand.u32 %v211, 4294901760
    %v213 = vsub.f32 %v211, %v212
    %v214 = vand.u32 %v213, 4294901760
    %215 = vmatpush1.msra.mxu0 %v214
    %216 = vmatprep.subr.mxu0 0.0
    %v217 = vand.u32 %v53, 4294901760
    %v218 = vsub.f32 %v53, %v217
    %v219 = vand.u32 %v218, 4294901760
    %v220 = vsub.f32 %v218, %v219
    %v221 = vand.u32 %v220, 4294901760
    %222 = vmatpush1.msra.mxu0 %v221
    %223 = vmatprep.subr.mxu0 0.0
    %v224 = vand.u32 %v54, 4294901760
    %v225 = vsub.f32 %v54, %v224
    %v226 = vand.u32 %v225, 4294901760
    %v227 = vsub.f32 %v225, %v226
    %v228 = vand.u32 %v227, 4294901760
    %229 = vmatpush1.msra.mxu0 %v228
    %230 = vmatprep.subr.mxu0 0.0
    %v231 = vand.u32 %v55, 4294901760
    %v232 = vsub.f32 %v55, %v231
    %v233 = vand.u32 %v232, 4294901760
    %v234 = vsub.f32 %v232, %v233
    %v235 = vand.u32 %v234, 4294901760
    %236 = vmatpush1.msra.mxu0 %v235
    %237 = vmatprep.subr.mxu0 0.0
    %v238 = vand.u32 %v56, 4294901760
    %v239 = vsub.f32 %v56, %v238
    %v240 = vand.u32 %v239, 4294901760
    %v241 = vsub.f32 %v239, %v240
    %v242 = vand.u32 %v241, 4294901760
    %243 = vmatpush1.msra.mxu0 %v242
    %244 = vmatprep.subr.mxu0 0.0
    %v245 = vand.u32 %v57, 4294901760
    %v246 = vsub.f32 %v57, %v245
    %v247 = vand.u32 %v246, 4294901760
    %v248 = vsub.f32 %v246, %v247
    %v249 = vand.u32 %v248, 4294901760
    %250 = vmatpush1.msra.mxu0 %v249
    %251 = vmatprep.subr.mxu0 0.0
    %v252 = vand.u32 %v58, 4294901760
    %v253 = vsub.f32 %v58, %v252
    %v254 = vand.u32 %v253, 4294901760
    %v255 = vsub.f32 %v253, %v254
    %v256 = vand.u32 %v255, 4294901760
    %257 = vmatpush1.msra.mxu0 %v256
    %258 = vmatprep.subr.mxu0 0.0
    %v259 = vand.u32 %v59, 4294901760
    %v260 = vsub.f32 %v59, %v259
    %v261 = vand.u32 %v260, 4294901760
    %v262 = vsub.f32 %v260, %v261
    %v263 = vand.u32 %v262, 4294901760
    %264 = vmatpush1.msra.mxu0 %v263
    %265 = vmatprep.subr.mxu0 0.0
    %v266 = vand.u32 %v60, 4294901760
    %v267 = vsub.f32 %v60, %v266
    %v268 = vand.u32 %v267, 4294901760
    %v269 = vsub.f32 %v267, %v268
    %v270 = vand.u32 %v269, 4294901760
    %271 = vmatpush1.msra.mxu0 %v270
    %272 = vmatprep.subr.mxu0 0.0
    %v273 = vand.u32 %v61, 4294901760
    %v274 = vsub.f32 %v61, %v273
    %v275 = vand.u32 %v274, 4294901760
    %v276 = vsub.f32 %v274, %v275
    %v277 = vand.u32 %v276, 4294901760
    %278 = vmatpush1.msra.mxu0 %v277
    %279 = vmatprep.subr.mxu0 0.0
    %v280 = vand.u32 %v62, 4294901760
    %v281 = vsub.f32 %v62, %v280
    %v282 = vand.u32 %v281, 4294901760
    %v283 = vsub.f32 %v281, %v282
    %v284 = vand.u32 %v283, 4294901760
    %285 = vmatpush1.msra.mxu0 %v284
    %286 = vmatprep.subr.mxu0 0.0
    %v287 = vand.u32 %v63, 4294901760
    %v288 = vsub.f32 %v63, %v287
    %v289 = vand.u32 %v288, 4294901760
    %v290 = vsub.f32 %v288, %v289
    %v291 = vand.u32 %v290, 4294901760
    %292 = vmatpush1.msra.mxu0 %v291
    %293 = vmatprep.subr.mxu0 0.0
    %v294 = vand.u32 %v64, 4294901760
    %v295 = vsub.f32 %v64, %v294
    %v296 = vand.u32 %v295, 4294901760
    %v297 = vsub.f32 %v295, %v296
    %v298 = vand.u32 %v297, 4294901760
    %299 = vmatpush1.msra.mxu0 %v298
    %300 = vmatprep.subr.mxu0 0.0
    %v301 = vand.u32 %v65, 4294901760
    %v302 = vsub.f32 %v65, %v301
    %v303 = vand.u32 %v302, 4294901760
    %v304 = vsub.f32 %v302, %v303
    %v305 = vand.u32 %v304, 4294901760
    %306 = vmatpush1.msra.mxu0 %v305
    %307 = vmatprep.subr.mxu0 0.0
    %v308 = vand.u32 %v66, 4294901760
    %v309 = vsub.f32 %v66, %v308
    %v310 = vand.u32 %v309, 4294901760
    %v311 = vsub.f32 %v309, %v310
    %v312 = vand.u32 %v311, 4294901760
    %313 = vmatpush1.msra.mxu0 %v312
    %314 = vmatprep.subr.mxu0 0.0
    %v315 = vand.u32 %v67, 4294901760
    %v316 = vsub.f32 %v67, %v315
    %v317 = vand.u32 %v316, 4294901760
    %v318 = vsub.f32 %v316, %v317
    %v319 = vand.u32 %v318, 4294901760
    %320 = vmatpush1.msra.mxu0 %v319
    %321 = vmatprep.subr.mxu0 0.0
    %v322 = vand.u32 %v68, 4294901760
    %v323 = vsub.f32 %v68, %v322
    %v324 = vand.u32 %v323, 4294901760
    %v325 = vsub.f32 %v323, %v324
    %v326 = vand.u32 %v325, 4294901760
    %327 = vmatpush1.msra.mxu0 %v326
    %328 = vmatprep.subr.mxu0 0.0
    %v329 = vand.u32 %v69, 4294901760
    %v330 = vsub.f32 %v69, %v329
    %v331 = vand.u32 %v330, 4294901760
    %v332 = vsub.f32 %v330, %v331
    %v333 = vand.u32 %v332, 4294901760
    %334 = vmatpush1.msra.mxu0 %v333
    %335 = vmatprep.subr.mxu0 0.0
    %v336 = vand.u32 %v70, 4294901760
    %v337 = vsub.f32 %v70, %v336
    %v338 = vand.u32 %v337, 4294901760
    %v339 = vsub.f32 %v337, %v338
    %v340 = vand.u32 %v339, 4294901760
    %341 = vmatpush1.msra.mxu0 %v340
    %342 = vmatprep.subr.mxu0 0.0
    %v343 = vand.u32 %v71, 4294901760
    %v344 = vsub.f32 %v71, %v343
    %v345 = vand.u32 %v344, 4294901760
    %v346 = vsub.f32 %v344, %v345
    %v347 = vand.u32 %v346, 4294901760
    %348 = vmatpush1.msra.mxu0 %v347
    %349 = vmatprep.subr.mxu0 0.0
    %v350 = vand.u32 %v72, 4294901760
    %v351 = vsub.f32 %v72, %v350
    %v352 = vand.u32 %v351, 4294901760
    %v353 = vsub.f32 %v351, %v352
    %v354 = vand.u32 %v353, 4294901760
    %355 = vmatpush1.msra.mxu0 %v354
    %356 = vmatprep.subr.mxu0 0.0
    %v357 = vand.u32 %v73, 4294901760
    %v358 = vsub.f32 %v73, %v357
    %v359 = vand.u32 %v358, 4294901760
    %v360 = vsub.f32 %v358, %v359
    %v361 = vand.u32 %v360, 4294901760
    %362 = vmatpush1.msra.mxu0 %v361
    %363 = vmatprep.subr.mxu0 0.0
    %v364 = vand.u32 %v74, 4294901760
    %v365 = vsub.f32 %v74, %v364
    %v366 = vand.u32 %v365, 4294901760
    %v367 = vsub.f32 %v365, %v366
    %v368 = vand.u32 %v367, 4294901760
    %369 = vmatpush1.msra.mxu0 %v368
    %370 = vmatprep.subr.mxu0 0.0
    %v371 = vand.u32 %v75, 4294901760
    %v372 = vsub.f32 %v75, %v371
    %v373 = vand.u32 %v372, 4294901760
    %v374 = vsub.f32 %v372, %v373
    %v375 = vand.u32 %v374, 4294901760
    %376 = vmatpush1.msra.mxu0 %v375
    %377 = vmatprep.subr.mxu0 0.0
    %v378 = vand.u32 %v76, 4294901760
    %v379 = vsub.f32 %v76, %v378
    %v380 = vand.u32 %v379, 4294901760
    %v381 = vsub.f32 %v379, %v380
    %v382 = vand.u32 %v381, 4294901760
    %383 = vmatpush1.msra.mxu0 %v382
    %384 = vmatprep.subr.mxu0 0.0
    %v385 = vand.u32 %v77, 4294901760
    %v386 = vsub.f32 %v77, %v385
    %v387 = vand.u32 %v386, 4294901760
    %v388 = vsub.f32 %v386, %v387
    %v389 = vand.u32 %v388, 4294901760
    %390 = vmatpush1.msra.mxu0 %v389
    %391 = vmatprep.subr.mxu0 0.0
    %v392 = vand.u32 %v78, 4294901760
    %v393 = vsub.f32 %v78, %v392
    %v394 = vand.u32 %v393, 4294901760
    %v395 = vsub.f32 %v393, %v394
    %v396 = vand.u32 %v395, 4294901760
    %397 = vmatpush1.msra.mxu0 %v396
    %398 = vmatprep.subr.mxu0 0.0
    %v399 = vand.u32 %v79, 4294901760
    %v400 = vsub.f32 %v79, %v399
    %v401 = vand.u32 %v400, 4294901760
    %v402 = vsub.f32 %v400, %v401
    %v403 = vand.u32 %v402, 4294901760
    %404 = vmatpush1.msra.mxu0 %v403
    %405 = vmatprep.subr.mxu0 0.0
    %v406 = vand.u32 %v80, 4294901760
    %v407 = vsub.f32 %v80, %v406
    %v408 = vand.u32 %v407, 4294901760
    %v409 = vsub.f32 %v407, %v408
    %v410 = vand.u32 %v409, 4294901760
    %411 = vmatpush1.msra.mxu0 %v410
    %412 = vmatprep.subr.mxu0 0.0
    %v413 = vand.u32 %v81, 4294901760
    %v414 = vsub.f32 %v81, %v413
    %v415 = vand.u32 %v414, 4294901760
    %v416 = vsub.f32 %v414, %v415
    %v417 = vand.u32 %v416, 4294901760
    %418 = vmatpush1.msra.mxu0 %v417
    %419 = vmatprep.subr.mxu0 0.0
    %v420 = vand.u32 %v82, 4294901760
    %v421 = vsub.f32 %v82, %v420
    %v422 = vand.u32 %v421, 4294901760
    %v423 = vsub.f32 %v421, %v422
    %v424 = vand.u32 %v423, 4294901760
    %425 = vmatpush1.msra.mxu0 %v424
    %426 = vmatprep.subr.mxu0 0.0
    %v427 = vand.u32 %v83, 4294901760
    %v428 = vsub.f32 %v83, %v427
    %v429 = vand.u32 %v428, 4294901760
    %v430 = vsub.f32 %v428, %v429
    %v431 = vand.u32 %v430, 4294901760
    %432 = vmatpush1.msra.mxu0 %v431
    %v433 = vand.u32 %v96, 4294901760
    %434 = vmatprep.mubr.f32.mxu0 %v433
    %v435 = vand.u32 %v94, 4294901760
    %436 = vmatmul.mubr.f32.gmra.mrb[0].mxu0 %v435
    %v437 = vpop.f32.mrb[0].mxu0
    %v438 = vadd.f32 %v206, %v437
    %v439 = vpop.f32.mrb[0].mxu0
    %440 = vdwg.mxu0
    %441 = vmatprep.subr.mxu0 0.0
    %v442 = vand.u32 %v52, 4294901760
    %v443 = vsub.f32 %v52, %v442
    %444 = vmatpush1.msra.mxu0 %v443
    %445 = vmatprep.subr.mxu0 0.0
    %v446 = vand.u32 %v53, 4294901760
    %v447 = vsub.f32 %v53, %v446
    %448 = vmatpush1.msra.mxu0 %v447
    %449 = vmatprep.subr.mxu0 0.0
    %v450 = vand.u32 %v54, 4294901760
    %v451 = vsub.f32 %v54, %v450
    %452 = vmatpush1.msra.mxu0 %v451
    %453 = vmatprep.subr.mxu0 0.0
    %v454 = vand.u32 %v55, 4294901760
    %v455 = vsub.f32 %v55, %v454
    %456 = vmatpush1.msra.mxu0 %v455
    %457 = vmatprep.subr.mxu0 0.0
    %v458 = vand.u32 %v56, 4294901760
    %v459 = vsub.f32 %v56, %v458
    %460 = vmatpush1.msra.mxu0 %v459
    %461 = vmatprep.subr.mxu0 0.0
    %v462 = vand.u32 %v57, 4294901760
    %v463 = vsub.f32 %v57, %v462
    %464 = vmatpush1.msra.mxu0 %v463
    %465 = vmatprep.subr.mxu0 0.0
    %v466 = vand.u32 %v58, 4294901760
    %v467 = vsub.f32 %v58, %v466
    %468 = vmatpush1.msra.mxu0 %v467
    %469 = vmatprep.subr.mxu0 0.0
    %v470 = vand.u32 %v59, 4294901760
    %v471 = vsub.f32 %v59, %v470
    %472 = vmatpush1.msra.mxu0 %v471
    %473 = vmatprep.subr.mxu0 0.0
    %v474 = vand.u32 %v60, 4294901760
    %v475 = vsub.f32 %v60, %v474
    %476 = vmatpush1.msra.mxu0 %v475
    %477 = vmatprep.subr.mxu0 0.0
    %v478 = vand.u32 %v61, 4294901760
    %v479 = vsub.f32 %v61, %v478
    %480 = vmatpush1.msra.mxu0 %v479
    %481 = vmatprep.subr.mxu0 0.0
    %v482 = vand.u32 %v62, 4294901760
    %v483 = vsub.f32 %v62, %v482
    %484 = vmatpush1.msra.mxu0 %v483
    %485 = vmatprep.subr.mxu0 0.0
    %v486 = vand.u32 %v63, 4294901760
    %v487 = vsub.f32 %v63, %v486
    %488 = vmatpush1.msra.mxu0 %v487
    %489 = vmatprep.subr.mxu0 0.0
    %v490 = vand.u32 %v64, 4294901760
    %v491 = vsub.f32 %v64, %v490
    %492 = vmatpush1.msra.mxu0 %v491
    %493 = vmatprep.subr.mxu0 0.0
    %v494 = vand.u32 %v65, 4294901760
    %v495 = vsub.f32 %v65, %v494
    %496 = vmatpush1.msra.mxu0 %v495
    %497 = vmatprep.subr.mxu0 0.0
    %v498 = vand.u32 %v66, 4294901760
    %v499 = vsub.f32 %v66, %v498
    %500 = vmatpush1.msra.mxu0 %v499
    %501 = vmatprep.subr.mxu0 0.0
    %v502 = vand.u32 %v67, 4294901760
    %v503 = vsub.f32 %v67, %v502
    %504 = vmatpush1.msra.mxu0 %v503
    %505 = vmatprep.subr.mxu0 0.0
    %v506 = vand.u32 %v68, 4294901760
    %v507 = vsub.f32 %v68, %v506
    %508 = vmatpush1.msra.mxu0 %v507
    %509 = vmatprep.subr.mxu0 0.0
    %v510 = vand.u32 %v69, 4294901760
    %v511 = vsub.f32 %v69, %v510
    %512 = vmatpush1.msra.mxu0 %v511
    %513 = vmatprep.subr.mxu0 0.0
    %v514 = vand.u32 %v70, 4294901760
    %v515 = vsub.f32 %v70, %v514
    %516 = vmatpush1.msra.mxu0 %v515
    %517 = vmatprep.subr.mxu0 0.0
    %v518 = vand.u32 %v71, 4294901760
    %v519 = vsub.f32 %v71, %v518
    %520 = vmatpush1.msra.mxu0 %v519
    %521 = vmatprep.subr.mxu0 0.0
    %v522 = vand.u32 %v72, 4294901760
    %v523 = vsub.f32 %v72, %v522
    %524 = vmatpush1.msra.mxu0 %v523
    %525 = vmatprep.subr.mxu0 0.0
    %v526 = vand.u32 %v73, 4294901760
    %v527 = vsub.f32 %v73, %v526
    %528 = vmatpush1.msra.mxu0 %v527
    %529 = vmatprep.subr.mxu0 0.0
    %v530 = vand.u32 %v74, 4294901760
    %v531 = vsub.f32 %v74, %v530
    %532 = vmatpush1.msra.mxu0 %v531
    %533 = vmatprep.subr.mxu0 0.0
    %v534 = vand.u32 %v75, 4294901760
    %v535 = vsub.f32 %v75, %v534
    %536 = vmatpush1.msra.mxu0 %v535
    %537 = vmatprep.subr.mxu0 0.0
    %v538 = vand.u32 %v76, 4294901760
    %v539 = vsub.f32 %v76, %v538
    %540 = vmatpush1.msra.mxu0 %v539
    %541 = vmatprep.subr.mxu0 0.0
    %v542 = vand.u32 %v77, 4294901760
    %v543 = vsub.f32 %v77, %v542
    %544 = vmatpush1.msra.mxu0 %v543
    %545 = vmatprep.subr.mxu0 0.0
    %v546 = vand.u32 %v78, 4294901760
    %v547 = vsub.f32 %v78, %v546
    %548 = vmatpush1.msra.mxu0 %v547
    %549 = vmatprep.subr.mxu0 0.0
    %v550 = vand.u32 %v79, 4294901760
    %v551 = vsub.f32 %v79, %v550
    %552 = vmatpush1.msra.mxu0 %v551
    %553 = vmatprep.subr.mxu0 0.0
    %v554 = vand.u32 %v80, 4294901760
    %v555 = vsub.f32 %v80, %v554
    %556 = vmatpush1.msra.mxu0 %v555
    %557 = vmatprep.subr.mxu0 0.0
    %v558 = vand.u32 %v81, 4294901760
    %v559 = vsub.f32 %v81, %v558
    %560 = vmatpush1.msra.mxu0 %v559
    %561 = vmatprep.subr.mxu0 0.0
    %v562 = vand.u32 %v82, 4294901760
    %v563 = vsub.f32 %v82, %v562
    %564 = vmatpush1.msra.mxu0 %v563
    %565 = vmatprep.subr.mxu0 0.0
    %v566 = vand.u32 %v83, 4294901760
    %v567 = vsub.f32 %v83, %v566
    %568 = vmatpush1.msra.mxu0 %v567
    %v569 = vand.u32 %v96, 4294901760
    %v570 = vsub.f32 %v96, %v569
    %571 = vmatprep.mubr.f32.mxu0 %v570
    %v572 = vand.u32 %v94, 4294901760
    %v573 = vsub.f32 %v94, %v572
    %574 = vmatmul.mubr.f32.gmra.mrb[0].mxu0 %v573
    %v575 = vpop.f32.mrb[0].mxu0
    %v576 = vadd.f32 %v438, %v575
    %v577 = vpop.f32.mrb[0].mxu0
    %578 = vdwg.mxu0
    %579 = vmatprep.subr.mxu0 0.0
    %v580 = vand.u32 %v52, 4294901760
    %581 = vmatpush1.msra.mxu0 %v580
    %582 = vmatprep.subr.mxu0 0.0
    %v583 = vand.u32 %v53, 4294901760
    %584 = vmatpush1.msra.mxu0 %v583
    %585 = vmatprep.subr.mxu0 0.0
    %v586 = vand.u32 %v54, 4294901760
    %587 = vmatpush1.msra.mxu0 %v586
    %588 = vmatprep.subr.mxu0 0.0
    %v589 = vand.u32 %v55, 4294901760
    %590 = vmatpush1.msra.mxu0 %v589
    %591 = vmatprep.subr.mxu0 0.0
    %v592 = vand.u32 %v56, 4294901760
    %593 = vmatpush1.msra.mxu0 %v592
    %594 = vmatprep.subr.mxu0 0.0
    %v595 = vand.u32 %v57, 4294901760
    %596 = vmatpush1.msra.mxu0 %v595
    %597 = vmatprep.subr.mxu0 0.0
    %v598 = vand.u32 %v58, 4294901760
    %599 = vmatpush1.msra.mxu0 %v598
    %600 = vmatprep.subr.mxu0 0.0
    %v601 = vand.u32 %v59, 4294901760
    %602 = vmatpush1.msra.mxu0 %v601
    %603 = vmatprep.subr.mxu0 0.0
    %v604 = vand.u32 %v60, 4294901760
    %605 = vmatpush1.msra.mxu0 %v604
    %606 = vmatprep.subr.mxu0 0.0
    %v607 = vand.u32 %v61, 4294901760
    %608 = vmatpush1.msra.mxu0 %v607
    %609 = vmatprep.subr.mxu0 0.0
    %v610 = vand.u32 %v62, 4294901760
    %611 = vmatpush1.msra.mxu0 %v610
    %612 = vmatprep.subr.mxu0 0.0
    %v613 = vand.u32 %v63, 4294901760
    %614 = vmatpush1.msra.mxu0 %v613
    %615 = vmatprep.subr.mxu0 0.0
    %v616 = vand.u32 %v64, 4294901760
    %617 = vmatpush1.msra.mxu0 %v616
    %618 = vmatprep.subr.mxu0 0.0
    %v619 = vand.u32 %v65, 4294901760
    %620 = vmatpush1.msra.mxu0 %v619
    %621 = vmatprep.subr.mxu0 0.0
    %v622 = vand.u32 %v66, 4294901760
    %623 = vmatpush1.msra.mxu0 %v622
    %624 = vmatprep.subr.mxu0 0.0
    %v625 = vand.u32 %v67, 4294901760
    %626 = vmatpush1.msra.mxu0 %v625
    %627 = vmatprep.subr.mxu0 0.0
    %v628 = vand.u32 %v68, 4294901760
    %629 = vmatpush1.msra.mxu0 %v628
    %630 = vmatprep.subr.mxu0 0.0
    %v631 = vand.u32 %v69, 4294901760
    %632 = vmatpush1.msra.mxu0 %v631
    %633 = vmatprep.subr.mxu0 0.0
    %v634 = vand.u32 %v70, 4294901760
    %635 = vmatpush1.msra.mxu0 %v634
    %636 = vmatprep.subr.mxu0 0.0
    %v637 = vand.u32 %v71, 4294901760
    %638 = vmatpush1.msra.mxu0 %v637
    %639 = vmatprep.subr.mxu0 0.0
    %v640 = vand.u32 %v72, 4294901760
    %641 = vmatpush1.msra.mxu0 %v640
    %642 = vmatprep.subr.mxu0 0.0
    %v643 = vand.u32 %v73, 4294901760
    %644 = vmatpush1.msra.mxu0 %v643
    %645 = vmatprep.subr.mxu0 0.0
    %v646 = vand.u32 %v74, 4294901760
    %647 = vmatpush1.msra.mxu0 %v646
    %648 = vmatprep.subr.mxu0 0.0
    %v649 = vand.u32 %v75, 4294901760
    %650 = vmatpush1.msra.mxu0 %v649
    %651 = vmatprep.subr.mxu0 0.0
    %v652 = vand.u32 %v76, 4294901760
    %653 = vmatpush1.msra.mxu0 %v652
    %654 = vmatprep.subr.mxu0 0.0
    %v655 = vand.u32 %v77, 4294901760
    %656 = vmatpush1.msra.mxu0 %v655
    %657 = vmatprep.subr.mxu0 0.0
    %v658 = vand.u32 %v78, 4294901760
    %659 = vmatpush1.msra.mxu0 %v658
    %660 = vmatprep.subr.mxu0 0.0
    %v661 = vand.u32 %v79, 4294901760
    %662 = vmatpush1.msra.mxu0 %v661
    %663 = vmatprep.subr.mxu0 0.0
    %v664 = vand.u32 %v80, 4294901760
    %665 = vmatpush1.msra.mxu0 %v664
    %666 = vmatprep.subr.mxu0 0.0
    %v667 = vand.u32 %v81, 4294901760
    %668 = vmatpush1.msra.mxu0 %v667
    %669 = vmatprep.subr.mxu0 0.0
    %v670 = vand.u32 %v82, 4294901760
    %671 = vmatpush1.msra.mxu0 %v670
    %672 = vmatprep.subr.mxu0 0.0
    %v673 = vand.u32 %v83, 4294901760
    %674 = vmatpush1.msra.mxu0 %v673
    %v675 = vand.u32 %v96, 4294901760
    %v676 = vsub.f32 %v96, %v675
    %v677 = vand.u32 %v676, 4294901760
    %678 = vmatprep.mubr.f32.mxu0 %v677
    %v679 = vand.u32 %v94, 4294901760
    %v680 = vsub.f32 %v94, %v679
    %v681 = vand.u32 %v680, 4294901760
    %682 = vmatmul.mubr.f32.gmra.mrb[0].mxu0 %v681
    %v683 = vpop.f32.mrb[0].mxu0
    %v684 = vadd.f32 %v576, %v683
    %v685 = vpop.f32.mrb[0].mxu0
    %686 = vdwg.mxu0
    %687 = vmatprep.subr.mxu0 0.0
    %v688 = vand.u32 %v52, 4294901760
    %v689 = vsub.f32 %v52, %v688
    %v690 = vand.u32 %v689, 4294901760
    %691 = vmatpush1.msra.mxu0 %v690
    %692 = vmatprep.subr.mxu0 0.0
    %v693 = vand.u32 %v53, 4294901760
    %v694 = vsub.f32 %v53, %v693
    %v695 = vand.u32 %v694, 4294901760
    %696 = vmatpush1.msra.mxu0 %v695
    %697 = vmatprep.subr.mxu0 0.0
    %v698 = vand.u32 %v54, 4294901760
    %v699 = vsub.f32 %v54, %v698
    %v700 = vand.u32 %v699, 4294901760
    %701 = vmatpush1.msra.mxu0 %v700
    %702 = vmatprep.subr.mxu0 0.0
    %v703 = vand.u32 %v55, 4294901760
    %v704 = vsub.f32 %v55, %v703
    %v705 = vand.u32 %v704, 4294901760
    %706 = vmatpush1.msra.mxu0 %v705
    %707 = vmatprep.subr.mxu0 0.0
    %v708 = vand.u32 %v56, 4294901760
    %v709 = vsub.f32 %v56, %v708
    %v710 = vand.u32 %v709, 4294901760
    %711 = vmatpush1.msra.mxu0 %v710
    %712 = vmatprep.subr.mxu0 0.0
    %v713 = vand.u32 %v57, 4294901760
    %v714 = vsub.f32 %v57, %v713
    %v715 = vand.u32 %v714, 4294901760
    %716 = vmatpush1.msra.mxu0 %v715
    %717 = vmatprep.subr.mxu0 0.0
    %v718 = vand.u32 %v58, 4294901760
    %v719 = vsub.f32 %v58, %v718
    %v720 = vand.u32 %v719, 4294901760
    %721 = vmatpush1.msra.mxu0 %v720
    %722 = vmatprep.subr.mxu0 0.0
    %v723 = vand.u32 %v59, 4294901760
    %v724 = vsub.f32 %v59, %v723
    %v725 = vand.u32 %v724, 4294901760
    %726 = vmatpush1.msra.mxu0 %v725
    %727 = vmatprep.subr.mxu0 0.0
    %v728 = vand.u32 %v60, 4294901760
    %v729 = vsub.f32 %v60, %v728
    %v730 = vand.u32 %v729, 4294901760
    %731 = vmatpush1.msra.mxu0 %v730
    %732 = vmatprep.subr.mxu0 0.0
    %v733 = vand.u32 %v61, 4294901760
    %v734 = vsub.f32 %v61, %v733
    %v735 = vand.u32 %v734, 4294901760
    %736 = vmatpush1.msra.mxu0 %v735
    %737 = vmatprep.subr.mxu0 0.0
    %v738 = vand.u32 %v62, 4294901760
    %v739 = vsub.f32 %v62, %v738
    %v740 = vand.u32 %v739, 4294901760
    %741 = vmatpush1.msra.mxu0 %v740
    %742 = vmatprep.subr.mxu0 0.0
    %v743 = vand.u32 %v63, 4294901760
    %v744 = vsub.f32 %v63, %v743
    %v745 = vand.u32 %v744, 4294901760
    %746 = vmatpush1.msra.mxu0 %v745
    %747 = vmatprep.subr.mxu0 0.0
    %v748 = vand.u32 %v64, 4294901760
    %v749 = vsub.f32 %v64, %v748
    %v750 = vand.u32 %v749, 4294901760
    %751 = vmatpush1.msra.mxu0 %v750
    %752 = vmatprep.subr.mxu0 0.0
    %v753 = vand.u32 %v65, 4294901760
    %v754 = vsub.f32 %v65, %v753
    %v755 = vand.u32 %v754, 4294901760
    %756 = vmatpush1.msra.mxu0 %v755
    %757 = vmatprep.subr.mxu0 0.0
    %v758 = vand.u32 %v66, 4294901760
    %v759 = vsub.f32 %v66, %v758
    %v760 = vand.u32 %v759, 4294901760
    %761 = vmatpush1.msra.mxu0 %v760
    %762 = vmatprep.subr.mxu0 0.0
    %v763 = vand.u32 %v67, 4294901760
    %v764 = vsub.f32 %v67, %v763
    %v765 = vand.u32 %v764, 4294901760
    %766 = vmatpush1.msra.mxu0 %v765
    %767 = vmatprep.subr.mxu0 0.0
    %v768 = vand.u32 %v68, 4294901760
    %v769 = vsub.f32 %v68, %v768
    %v770 = vand.u32 %v769, 4294901760
    %771 = vmatpush1.msra.mxu0 %v770
    %772 = vmatprep.subr.mxu0 0.0
    %v773 = vand.u32 %v69, 4294901760
    %v774 = vsub.f32 %v69, %v773
    %v775 = vand.u32 %v774, 4294901760
    %776 = vmatpush1.msra.mxu0 %v775
    %777 = vmatprep.subr.mxu0 0.0
    %v778 = vand.u32 %v70, 4294901760
    %v779 = vsub.f32 %v70, %v778
    %v780 = vand.u32 %v779, 4294901760
    %781 = vmatpush1.msra.mxu0 %v780
    %782 = vmatprep.subr.mxu0 0.0
    %v783 = vand.u32 %v71, 4294901760
    %v784 = vsub.f32 %v71, %v783
    %v785 = vand.u32 %v784, 4294901760
    %786 = vmatpush1.msra.mxu0 %v785
    %787 = vmatprep.subr.mxu0 0.0
    %v788 = vand.u32 %v72, 4294901760
    %v789 = vsub.f32 %v72, %v788
    %v790 = vand.u32 %v789, 4294901760
    %791 = vmatpush1.msra.mxu0 %v790
    %792 = vmatprep.subr.mxu0 0.0
    %v793 = vand.u32 %v73, 4294901760
    %v794 = vsub.f32 %v73, %v793
    %v795 = vand.u32 %v794, 4294901760
    %796 = vmatpush1.msra.mxu0 %v795
    %797 = vmatprep.subr.mxu0 0.0
    %v798 = vand.u32 %v74, 4294901760
    %v799 = vsub.f32 %v74, %v798
    %v800 = vand.u32 %v799, 4294901760
    %801 = vmatpush1.msra.mxu0 %v800
    %802 = vmatprep.subr.mxu0 0.0
    %v803 = vand.u32 %v75, 4294901760
    %v804 = vsub.f32 %v75, %v803
    %v805 = vand.u32 %v804, 4294901760
    %806 = vmatpush1.msra.mxu0 %v805
    %807 = vmatprep.subr.mxu0 0.0
    %v808 = vand.u32 %v76, 4294901760
    %v809 = vsub.f32 %v76, %v808
    %v810 = vand.u32 %v809, 4294901760
    %811 = vmatpush1.msra.mxu0 %v810
    %812 = vmatprep.subr.mxu0 0.0
    %v813 = vand.u32 %v77, 4294901760
    %v814 = vsub.f32 %v77, %v813
    %v815 = vand.u32 %v814, 4294901760
    %816 = vmatpush1.msra.mxu0 %v815
    %817 = vmatprep.subr.mxu0 0.0
    %v818 = vand.u32 %v78, 4294901760
    %v819 = vsub.f32 %v78, %v818
    %v820 = vand.u32 %v819, 4294901760
    %821 = vmatpush1.msra.mxu0 %v820
    %822 = vmatprep.subr.mxu0 0.0
    %v823 = vand.u32 %v79, 4294901760
    %v824 = vsub.f32 %v79, %v823
    %v825 = vand.u32 %v824, 4294901760
    %826 = vmatpush1.msra.mxu0 %v825
    %827 = vmatprep.subr.mxu0 0.0
    %v828 = vand.u32 %v80, 4294901760
    %v829 = vsub.f32 %v80, %v828
    %v830 = vand.u32 %v829, 4294901760
    %831 = vmatpush1.msra.mxu0 %v830
    %832 = vmatprep.subr.mxu0 0.0
    %v833 = vand.u32 %v81, 4294901760
    %v834 = vsub.f32 %v81, %v833
    %v835 = vand.u32 %v834, 4294901760
    %836 = vmatpush1.msra.mxu0 %v835
    %837 = vmatprep.subr.mxu0 0.0
    %v838 = vand.u32 %v82, 4294901760
    %v839 = vsub.f32 %v82, %v838
    %v840 = vand.u32 %v839, 4294901760
    %841 = vmatpush1.msra.mxu0 %v840
    %842 = vmatprep.subr.mxu0 0.0
    %v843 = vand.u32 %v83, 4294901760
    %v844 = vsub.f32 %v83, %v843
    %v845 = vand.u32 %v844, 4294901760
    %846 = vmatpush1.msra.mxu0 %v845
    %v847 = vand.u32 %v96, 4294901760
    %848 = vmatprep.mubr.f32.mxu0 %v847
    %v849 = vand.u32 %v94, 4294901760
    %850 = vmatmul.mubr.f32.gmra.mrb[0].mxu0 %v849
    %v851 = vpop.f32.mrb[0].mxu0
    %v852 = vadd.f32 %v684, %v851
    %v853 = vpop.f32.mrb[0].mxu0
    %854 = vdwg.mxu0
    %855 = vmatprep.subr.mxu0 0.0
    %v856 = vand.u32 %v52, 4294901760
    %857 = vmatpush1.msra.mxu0 %v856
    %858 = vmatprep.subr.mxu0 0.0
    %v859 = vand.u32 %v53, 4294901760
    %860 = vmatpush1.msra.mxu0 %v859
    %861 = vmatprep.subr.mxu0 0.0
    %v862 = vand.u32 %v54, 4294901760
    %863 = vmatpush1.msra.mxu0 %v862
    %864 = vmatprep.subr.mxu0 0.0
    %v865 = vand.u32 %v55, 4294901760
    %866 = vmatpush1.msra.mxu0 %v865
    %867 = vmatprep.subr.mxu0 0.0
    %v868 = vand.u32 %v56, 4294901760
    %869 = vmatpush1.msra.mxu0 %v868
    %870 = vmatprep.subr.mxu0 0.0
    %v871 = vand.u32 %v57, 4294901760
    %872 = vmatpush1.msra.mxu0 %v871
    %873 = vmatprep.subr.mxu0 0.0
    %v874 = vand.u32 %v58, 4294901760
    %875 = vmatpush1.msra.mxu0 %v874
    %876 = vmatprep.subr.mxu0 0.0
    %v877 = vand.u32 %v59, 4294901760
    %878 = vmatpush1.msra.mxu0 %v877
    %879 = vmatprep.subr.mxu0 0.0
    %v880 = vand.u32 %v60, 4294901760
    %881 = vmatpush1.msra.mxu0 %v880
    %882 = vmatprep.subr.mxu0 0.0
    %v883 = vand.u32 %v61, 4294901760
    %884 = vmatpush1.msra.mxu0 %v883
    %885 = vmatprep.subr.mxu0 0.0
    %v886 = vand.u32 %v62, 4294901760
    %887 = vmatpush1.msra.mxu0 %v886
    %888 = vmatprep.subr.mxu0 0.0
    %v889 = vand.u32 %v63, 4294901760
    %890 = vmatpush1.msra.mxu0 %v889
    %891 = vmatprep.subr.mxu0 0.0
    %v892 = vand.u32 %v64, 4294901760
    %893 = vmatpush1.msra.mxu0 %v892
    %894 = vmatprep.subr.mxu0 0.0
    %v895 = vand.u32 %v65, 4294901760
    %896 = vmatpush1.msra.mxu0 %v895
    %897 = vmatprep.subr.mxu0 0.0
    %v898 = vand.u32 %v66, 4294901760
    %899 = vmatpush1.msra.mxu0 %v898
    %900 = vmatprep.subr.mxu0 0.0
    %v901 = vand.u32 %v67, 4294901760
    %902 = vmatpush1.msra.mxu0 %v901
    %903 = vmatprep.subr.mxu0 0.0
    %v904 = vand.u32 %v68, 4294901760
    %905 = vmatpush1.msra.mxu0 %v904
    %906 = vmatprep.subr.mxu0 0.0
    %v907 = vand.u32 %v69, 4294901760
    %908 = vmatpush1.msra.mxu0 %v907
    %909 = vmatprep.subr.mxu0 0.0
    %v910 = vand.u32 %v70, 4294901760
    %911 = vmatpush1.msra.mxu0 %v910
    %912 = vmatprep.subr.mxu0 0.0
    %v913 = vand.u32 %v71, 4294901760
    %914 = vmatpush1.msra.mxu0 %v913
    %915 = vmatprep.subr.mxu0 0.0
    %v916 = vand.u32 %v72, 4294901760
    %917 = vmatpush1.msra.mxu0 %v916
    %918 = vmatprep.subr.mxu0 0.0
    %v919 = vand.u32 %v73, 4294901760
    %920 = vmatpush1.msra.mxu0 %v919
    %921 = vmatprep.subr.mxu0 0.0
    %v922 = vand.u32 %v74, 4294901760
    %923 = vmatpush1.msra.mxu0 %v922
    %924 = vmatprep.subr.mxu0 0.0
    %v925 = vand.u32 %v75, 4294901760
    %926 = vmatpush1.msra.mxu0 %v925
    %927 = vmatprep.subr.mxu0 0.0
    %v928 = vand.u32 %v76, 4294901760
    %929 = vmatpush1.msra.mxu0 %v928
    %930 = vmatprep.subr.mxu0 0.0
    %v931 = vand.u32 %v77, 4294901760
    %932 = vmatpush1.msra.mxu0 %v931
    %933 = vmatprep.subr.mxu0 0.0
    %v934 = vand.u32 %v78, 4294901760
    %935 = vmatpush1.msra.mxu0 %v934
    %936 = vmatprep.subr.mxu0 0.0
    %v937 = vand.u32 %v79, 4294901760
    %938 = vmatpush1.msra.mxu0 %v937
    %939 = vmatprep.subr.mxu0 0.0
    %v940 = vand.u32 %v80, 4294901760
    %941 = vmatpush1.msra.mxu0 %v940
    %942 = vmatprep.subr.mxu0 0.0
    %v943 = vand.u32 %v81, 4294901760
    %944 = vmatpush1.msra.mxu0 %v943
    %945 = vmatprep.subr.mxu0 0.0
    %v946 = vand.u32 %v82, 4294901760
    %947 = vmatpush1.msra.mxu0 %v946
    %948 = vmatprep.subr.mxu0 0.0
    %v949 = vand.u32 %v83, 4294901760
    %950 = vmatpush1.msra.mxu0 %v949
    %v951 = vand.u32 %v96, 4294901760
    %952 = vmatprep.mubr.f32.mxu0 %v951
    %v953 = vand.u32 %v94, 4294901760
    %954 = vmatmul.mubr.f32.gmra.mrb[0].mxu0 %v953
    %v955 = vpop.f32.mrb[0].mxu0
    %v956 = vadd.f32 %v852, %v955
    %v957 = vpop.f32.mrb[0].mxu0
    %958 = vdwg.mxu0
    %v959 = vrcp.pop %v956
    %v960 = vmul.f32 1.0, %v959
    %962 = vrot.lane.b32.xlu0 %v960, 1
    %v963 = vpop.permute.xlu0 %962
    %v965 = vmul.f32 %v956, %v963
    %v966 = vsub.f32 %v965, 8.0
    %967 = vrot.lane.b32.xlu0 %v960, 2
    %v968 = vpop.permute.xlu0 %967
    %v970 = vmul.f32 %v956, %v968
    %v971 = vsub.f32 %v970, 8.0
    %v972 = vld [vmem:[#allocation5] sm:$0xff]
    %v973 = vld [vmem:[#allocation5 + $0x8] sm:$0xff]
    %v974 = vmul.f32 %v972, 10000.0
    %v975 = vmul.f32 %v973, 10000.0
    %v976 = vmax.f32 %v974, %v975
    %977 = vmax.xlane.f32.xlu0 %v976
    %v978 = vpop.xlane.xlu0 %977
    %v979 = vsub.f32 %v974, %v978
    %v980 = vsub.f32 %v975, %v978
    %v981 = vmul.f32 %v979, 1.442695
    %v982 = vpow.pop %v981
    %v983 = vmul.f32 %v980, 1.442695
    %v984 = vpow.pop %v983
    %985 = vmatprep.subr.mxu0 0.0
    %v986 = vand.u32 %v52, 4294901760
    %987 = vmatpush1.msra.mxu0 %v986
    %988 = vmatprep.subr.mxu0 0.0
    %v989 = vand.u32 %v53, 4294901760
    %990 = vmatpush1.msra.mxu0 %v989
    %991 = vmatprep.subr.mxu0 0.0
    %v992 = vand.u32 %v54, 4294901760
    %993 = vmatpush1.msra.mxu0 %v992
    %994 = vmatprep.subr.mxu0 0.0
    %v995 = vand.u32 %v55, 4294901760
    %996 = vmatpush1.msra.mxu0 %v995
    %997 = vmatprep.subr.mxu0 0.0
    %v998 = vand.u32 %v56, 4294901760
    %999 = vmatpush1.msra.mxu0 %v998
    %1000 = vmatprep.subr.mxu0 0.0
    %v1001 = vand.u32 %v57, 4294901760
    %1002 = vmatpush1.msra.mxu0 %v1001
    %1003 = vmatprep.subr.mxu0 0.0
    %v1004 = vand.u32 %v58, 4294901760
    %1005 = vmatpush1.msra.mxu0 %v1004
    %1006 = vmatprep.subr.mxu0 0.0
    %v1007 = vand.u32 %v59, 4294901760
    %1008 = vmatpush1.msra.mxu0 %v1007
    %1009 = vmatprep.subr.mxu0 0.0
    %v1010 = vand.u32 %v60, 4294901760
    %1011 = vmatpush1.msra.mxu0 %v1010
    %1012 = vmatprep.subr.mxu0 0.0
    %v1013 = vand.u32 %v61, 4294901760
    %1014 = vmatpush1.msra.mxu0 %v1013
    %1015 = vmatprep.subr.mxu0 0.0
    %v1016 = vand.u32 %v62, 4294901760
    %1017 = vmatpush1.msra.mxu0 %v1016
    %1018 = vmatprep.subr.mxu0 0.0
    %v1019 = vand.u32 %v63, 4294901760
    %1020 = vmatpush1.msra.mxu0 %v1019
    %1021 = vmatprep.subr.mxu0 0.0
    %v1022 = vand.u32 %v64, 4294901760
    %1023 = vmatpush1.msra.mxu0 %v1022
    %1024 = vmatprep.subr.mxu0 0.0
    %v1025 = vand.u32 %v65, 4294901760
    %1026 = vmatpush1.msra.mxu0 %v1025
    %1027 = vmatprep.subr.mxu0 0.0
    %v1028 = vand.u32 %v66, 4294901760
    %1029 = vmatpush1.msra.mxu0 %v1028
    %1030 = vmatprep.subr.mxu0 0.0
    %v1031 = vand.u32 %v67, 4294901760
    %1032 = vmatpush1.msra.mxu0 %v1031
    %1033 = vmatprep.subr.mxu0 0.0
    %v1034 = vand.u32 %v68, 4294901760
    %1035 = vmatpush1.msra.mxu0 %v1034
    %1036 = vmatprep.subr.mxu0 0.0
    %v1037 = vand.u32 %v69, 4294901760
    %1038 = vmatpush1.msra.mxu0 %v1037
    %1039 = vmatprep.subr.mxu0 0.0
    %v1040 = vand.u32 %v70, 4294901760
    %1041 = vmatpush1.msra.mxu0 %v1040
    %1042 = vmatprep.subr.mxu0 0.0
    %v1043 = vand.u32 %v71, 4294901760
    %1044 = vmatpush1.msra.mxu0 %v1043
    %1045 = vmatprep.subr.mxu0 0.0
    %v1046 = vand.u32 %v72, 4294901760
    %1047 = vmatpush1.msra.mxu0 %v1046
    %1048 = vmatprep.subr.mxu0 0.0
    %v1049 = vand.u32 %v73, 4294901760
    %1050 = vmatpush1.msra.mxu0 %v1049
    %1051 = vmatprep.subr.mxu0 0.0
    %v1052 = vand.u32 %v74, 4294901760
    %1053 = vmatpush1.msra.mxu0 %v1052
    %1054 = vmatprep.subr.mxu0 0.0
    %v1055 = vand.u32 %v75, 4294901760
    %1056 = vmatpush1.msra.mxu0 %v1055
    %1057 = vmatprep.subr.mxu0 0.0
    %v1058 = vand.u32 %v76, 4294901760
    %1059 = vmatpush1.msra.mxu0 %v1058
    %1060 = vmatprep.subr.mxu0 0.0
    %v1061 = vand.u32 %v77, 4294901760
    %1062 = vmatpush1.msra.mxu0 %v1061
    %1063 = vmatprep.subr.mxu0 0.0
    %v1064 = vand.u32 %v78, 4294901760
    %1065 = vmatpush1.msra.mxu0 %v1064
    %1066 = vmatprep.subr.mxu0 0.0
    %v1067 = vand.u32 %v79, 4294901760
    %1068 = vmatpush1.msra.mxu0 %v1067
    %1069 = vmatprep.subr.mxu0 0.0
    %v1070 = vand.u32 %v80, 4294901760
    %1071 = vmatpush1.msra.mxu0 %v1070
    %1072 = vmatprep.subr.mxu0 0.0
    %v1073 = vand.u32 %v81, 4294901760
    %1074 = vmatpush1.msra.mxu0 %v1073
    %1075 = vmatprep.subr.mxu0 0.0
    %v1076 = vand.u32 %v82, 4294901760
    %1077 = vmatpush1.msra.mxu0 %v1076
    %1078 = vmatprep.subr.mxu0 0.0
    %v1079 = vand.u32 %v83, 4294901760
    %1080 = vmatpush1.msra.mxu0 %v1079
    %v1081 = vand.u32 %v984, 4294901760
    %v1082 = vsub.f32 %v984, %v1081
    %v1083 = vand.u32 %v1082, 4294901760
    %v1084 = vsub.f32 %v1082, %v1083
    %v1085 = vand.u32 %v1084, 4294901760
    %1086 = vmatprep.mubr.f32.mxu0 %v1085
    %v1087 = vand.u32 %v982, 4294901760
    %v1088 = vsub.f32 %v982, %v1087
    %v1089 = vand.u32 %v1088, 4294901760
    %v1090 = vsub.f32 %v1088, %v1089
    %v1091 = vand.u32 %v1090, 4294901760
    %1092 = vmatmul.mubr.f32.gmra.mrb[0].mxu0 %v1091
    %v1093 = vpop.f32.mrb[0].mxu0
    %v1094 = vadd.f32 0.0, %v1093
    %v1095 = vpop.f32.mrb[0].mxu0
    %1096 = vdwg.mxu0
    %1097 = vmatprep.subr.mxu0 0.0
    %v1098 = vand.u32 %v52, 4294901760
    %v1099 = vsub.f32 %v52, %v1098
    %v1100 = vand.u32 %v1099, 4294901760
    %v1101 = vsub.f32 %v1099, %v1100
    %v1102 = vand.u32 %v1101, 4294901760
    %1103 = vmatpush1.msra.mxu0 %v1102
    %1104 = vmatprep.subr.mxu0 0.0
    %v1105 = vand.u32 %v53, 4294901760
    %v1106 = vsub.f32 %v53, %v1105
    %v1107 = vand.u32 %v1106, 4294901760
    %v1108 = vsub.f32 %v1106, %v1107
    %v1109 = vand.u32 %v1108, 4294901760
    %1110 = vmatpush1.msra.mxu0 %v1109
    %1111 = vmatprep.subr.mxu0 0.0
    %v1112 = vand.u32 %v54, 4294901760
    %v1113 = vsub.f32 %v54, %v1112
    %v1114 = vand.u32 %v1113, 4294901760
    %v1115 = vsub.f32 %v1113, %v1114
    %v1116 = vand.u32 %v1115, 4294901760
    %1117 = vmatpush1.msra.mxu0 %v1116
    %1118 = vmatprep.subr.mxu0 0.0
    %v1119 = vand.u32 %v55, 4294901760
    %v1120 = vsub.f32 %v55, %v1119
    %v1121 = vand.u32 %v1120, 4294901760
    %v1122 = vsub.f32 %v1120, %v1121
    %v1123 = vand.u32 %v1122, 4294901760
    %1124 = vmatpush1.msra.mxu0 %v1123
    %1125 = vmatprep.subr.mxu0 0.0
    %v1126 = vand.u32 %v56, 4294901760
    %v1127 = vsub.f32 %v56, %v1126
    %v1128 = vand.u32 %v1127, 4294901760
    %v1129 = vsub.f32 %v1127, %v1128
    %v1130 = vand.u32 %v1129, 4294901760
    %1131 = vmatpush1.msra.mxu0 %v1130
    %1132 = vmatprep.subr.mxu0 0.0
    %v1133 = vand.u32 %v57, 4294901760
    %v1134 = vsub.f32 %v57, %v1133
    %v1135 = vand.u32 %v1134, 4294901760
    %v1136 = vsub.f32 %v1134, %v1135
    %v1137 = vand.u32 %v1136, 4294901760
    %1138 = vmatpush1.msra.mxu0 %v1137
    %1139 = vmatprep.subr.mxu0 0.0
    %v1140 = vand.u32 %v58, 4294901760
    %v1141 = vsub.f32 %v58, %v1140
    %v1142 = vand.u32 %v1141, 4294901760
    %v1143 = vsub.f32 %v1141, %v1142
    %v1144 = vand.u32 %v1143, 4294901760
    %1145 = vmatpush1.msra.mxu0 %v1144
    %1146 = vmatprep.subr.mxu0 0.0
    %v1147 = vand.u32 %v59, 4294901760
    %v1148 = vsub.f32 %v59, %v1147
    %v1149 = vand.u32 %v1148, 4294901760
    %v1150 = vsub.f32 %v1148, %v1149
    %v1151 = vand.u32 %v1150, 4294901760
    %1152 = vmatpush1.msra.mxu0 %v1151
    %1153 = vmatprep.subr.mxu0 0.0
    %v1154 = vand.u32 %v60, 4294901760
    %v1155 = vsub.f32 %v60, %v1154
    %v1156 = vand.u32 %v1155, 4294901760
    %v1157 = vsub.f32 %v1155, %v1156
    %v1158 = vand.u32 %v1157, 4294901760
    %1159 = vmatpush1.msra.mxu0 %v1158
    %1160 = vmatprep.subr.mxu0 0.0
    %v1161 = vand.u32 %v61, 4294901760
    %v1162 = vsub.f32 %v61, %v1161
    %v1163 = vand.u32 %v1162, 4294901760
    %v1164 = vsub.f32 %v1162, %v1163
    %v1165 = vand.u32 %v1164, 4294901760
    %1166 = vmatpush1.msra.mxu0 %v1165
    %1167 = vmatprep.subr.mxu0 0.0
    %v1168 = vand.u32 %v62, 4294901760
    %v1169 = vsub.f32 %v62, %v1168
    %v1170 = vand.u32 %v1169, 4294901760
    %v1171 = vsub.f32 %v1169, %v1170
    %v1172 = vand.u32 %v1171, 4294901760
    %1173 = vmatpush1.msra.mxu0 %v1172
    %1174 = vmatprep.subr.mxu0 0.0
    %v1175 = vand.u32 %v63, 4294901760
    %v1176 = vsub.f32 %v63, %v1175
    %v1177 = vand.u32 %v1176, 4294901760
    %v1178 = vsub.f32 %v1176, %v1177
    %v1179 = vand.u32 %v1178, 4294901760
    %1180 = vmatpush1.msra.mxu0 %v1179
    %1181 = vmatprep.subr.mxu0 0.0
    %v1182 = vand.u32 %v64, 4294901760
    %v1183 = vsub.f32 %v64, %v1182
    %v1184 = vand.u32 %v1183, 4294901760
    %v1185 = vsub.f32 %v1183, %v1184
    %v1186 = vand.u32 %v1185, 4294901760
    %1187 = vmatpush1.msra.mxu0 %v1186
    %1188 = vmatprep.subr.mxu0 0.0
    %v1189 = vand.u32 %v65, 4294901760
    %v1190 = vsub.f32 %v65, %v1189
    %v1191 = vand.u32 %v1190, 4294901760
    %v1192 = vsub.f32 %v1190, %v1191
    %v1193 = vand.u32 %v1192, 4294901760
    %1194 = vmatpush1.msra.mxu0 %v1193
    %1195 = vmatprep.subr.mxu0 0.0
    %v1196 = vand.u32 %v66, 4294901760
    %v1197 = vsub.f32 %v66, %v1196
    %v1198 = vand.u32 %v1197, 4294901760
    %v1199 = vsub.f32 %v1197, %v1198
    %v1200 = vand.u32 %v1199, 4294901760
    %1201 = vmatpush1.msra.mxu0 %v1200
    %1202 = vmatprep.subr.mxu0 0.0
    %v1203 = vand.u32 %v67, 4294901760
    %v1204 = vsub.f32 %v67, %v1203
    %v1205 = vand.u32 %v1204, 4294901760
    %v1206 = vsub.f32 %v1204, %v1205
    %v1207 = vand.u32 %v1206, 4294901760
    %1208 = vmatpush1.msra.mxu0 %v1207
    %1209 = vmatprep.subr.mxu0 0.0
    %v1210 = vand.u32 %v68, 4294901760
    %v1211 = vsub.f32 %v68, %v1210
    %v1212 = vand.u32 %v1211, 4294901760
    %v1213 = vsub.f32 %v1211, %v1212
    %v1214 = vand.u32 %v1213, 4294901760
    %1215 = vmatpush1.msra.mxu0 %v1214
    %1216 = vmatprep.subr.mxu0 0.0
    %v1217 = vand.u32 %v69, 4294901760
    %v1218 = vsub.f32 %v69, %v1217
    %v1219 = vand.u32 %v1218, 4294901760
    %v1220 = vsub.f32 %v1218, %v1219
    %v1221 = vand.u32 %v1220, 4294901760
    %1222 = vmatpush1.msra.mxu0 %v1221
    %1223 = vmatprep.subr.mxu0 0.0
    %v1224 = vand.u32 %v70, 4294901760
    %v1225 = vsub.f32 %v70, %v1224
    %v1226 = vand.u32 %v1225, 4294901760
    %v1227 = vsub.f32 %v1225, %v1226
    %v1228 = vand.u32 %v1227, 4294901760
    %1229 = vmatpush1.msra.mxu0 %v1228
    %1230 = vmatprep.subr.mxu0 0.0
    %v1231 = vand.u32 %v71, 4294901760
    %v1232 = vsub.f32 %v71, %v1231
    %v1233 = vand.u32 %v1232, 4294901760
    %v1234 = vsub.f32 %v1232, %v1233
    %v1235 = vand.u32 %v1234, 4294901760
    %1236 = vmatpush1.msra.mxu0 %v1235
    %1237 = vmatprep.subr.mxu0 0.0
    %v1238 = vand.u32 %v72, 4294901760
    %v1239 = vsub.f32 %v72, %v1238
    %v1240 = vand.u32 %v1239, 4294901760
    %v1241 = vsub.f32 %v1239, %v1240
    %v1242 = vand.u32 %v1241, 4294901760
    %1243 = vmatpush1.msra.mxu0 %v1242
    %1244 = vmatprep.subr.mxu0 0.0
    %v1245 = vand.u32 %v73, 4294901760
    %v1246 = vsub.f32 %v73, %v1245
    %v1247 = vand.u32 %v1246, 4294901760
    %v1248 = vsub.f32 %v1246, %v1247
    %v1249 = vand.u32 %v1248, 4294901760
    %1250 = vmatpush1.msra.mxu0 %v1249
    %1251 = vmatprep.subr.mxu0 0.0
    %v1252 = vand.u32 %v74, 4294901760
    %v1253 = vsub.f32 %v74, %v1252
    %v1254 = vand.u32 %v1253, 4294901760
    %v1255 = vsub.f32 %v1253, %v1254
    %v1256 = vand.u32 %v1255, 4294901760
    %1257 = vmatpush1.msra.mxu0 %v1256
    %1258 = vmatprep.subr.mxu0 0.0
    %v1259 = vand.u32 %v75, 4294901760
    %v1260 = vsub.f32 %v75, %v1259
    %v1261 = vand.u32 %v1260, 4294901760
    %v1262 = vsub.f32 %v1260, %v1261
    %v1263 = vand.u32 %v1262, 4294901760
    %1264 = vmatpush1.msra.mxu0 %v1263
    %1265 = vmatprep.subr.mxu0 0.0
    %v1266 = vand.u32 %v76, 4294901760
    %v1267 = vsub.f32 %v76, %v1266
    %v1268 = vand.u32 %v1267, 4294901760
    %v1269 = vsub.f32 %v1267, %v1268
    %v1270 = vand.u32 %v1269, 4294901760
    %1271 = vmatpush1.msra.mxu0 %v1270
    %1272 = vmatprep.subr.mxu0 0.0
    %v1273 = vand.u32 %v77, 4294901760
    %v1274 = vsub.f32 %v77, %v1273
    %v1275 = vand.u32 %v1274, 4294901760
    %v1276 = vsub.f32 %v1274, %v1275
    %v1277 = vand.u32 %v1276, 4294901760
    %1278 = vmatpush1.msra.mxu0 %v1277
    %1279 = vmatprep.subr.mxu0 0.0
    %v1280 = vand.u32 %v78, 4294901760
    %v1281 = vsub.f32 %v78, %v1280
    %v1282 = vand.u32 %v1281, 4294901760
    %v1283 = vsub.f32 %v1281, %v1282
    %v1284 = vand.u32 %v1283, 4294901760
    %1285 = vmatpush1.msra.mxu0 %v1284
    %1286 = vmatprep.subr.mxu0 0.0
    %v1287 = vand.u32 %v79, 4294901760
    %v1288 = vsub.f32 %v79, %v1287
    %v1289 = vand.u32 %v1288, 4294901760
    %v1290 = vsub.f32 %v1288, %v1289
    %v1291 = vand.u32 %v1290, 4294901760
    %1292 = vmatpush1.msra.mxu0 %v1291
    %1293 = vmatprep.subr.mxu0 0.0
    %v1294 = vand.u32 %v80, 4294901760
    %v1295 = vsub.f32 %v80, %v1294
    %v1296 = vand.u32 %v1295, 4294901760
    %v1297 = vsub.f32 %v1295, %v1296
    %v1298 = vand.u32 %v1297, 4294901760
    %1299 = vmatpush1.msra.mxu0 %v1298
    %1300 = vmatprep.subr.mxu0 0.0
    %v1301 = vand.u32 %v81, 4294901760
    %v1302 = vsub.f32 %v81, %v1301
    %v1303 = vand.u32 %v1302, 4294901760
    %v1304 = vsub.f32 %v1302, %v1303
    %v1305 = vand.u32 %v1304, 4294901760
    %1306 = vmatpush1.msra.mxu0 %v1305
    %1307 = vmatprep.subr.mxu0 0.0
    %v1308 = vand.u32 %v82, 4294901760
    %v1309 = vsub.f32 %v82, %v1308
    %v1310 = vand.u32 %v1309, 4294901760
    %v1311 = vsub.f32 %v1309, %v1310
    %v1312 = vand.u32 %v1311, 4294901760
    %1313 = vmatpush1.msra.mxu0 %v1312
    %1314 = vmatprep.subr.mxu0 0.0
    %v1315 = vand.u32 %v83, 4294901760
    %v1316 = vsub.f32 %v83, %v1315
    %v1317 = vand.u32 %v1316, 4294901760
    %v1318 = vsub.f32 %v1316, %v1317
    %v1319 = vand.u32 %v1318, 4294901760
    %1320 = vmatpush1.msra.mxu0 %v1319
    %v1321 = vand.u32 %v984, 4294901760
    %1322 = vmatprep.mubr.f32.mxu0 %v1321
    %v1323 = vand.u32 %v982, 4294901760
    %1324 = vmatmul.mubr.f32.gmra.mrb[0].mxu0 %v1323
    %v1325 = vpop.f32.mrb[0].mxu0
    %v1326 = vadd.f32 %v1094, %v1325
    %v1327 = vpop.f32.mrb[0].mxu0
    %1328 = vdwg.mxu0
    %1329 = vmatprep.subr.mxu0 0.0
    %v1330 = vand.u32 %v52, 4294901760
    %v1331 = vsub.f32 %v52, %v1330
    %1332 = vmatpush1.msra.mxu0 %v1331
    %1333 = vmatprep.subr.mxu0 0.0
    %v1334 = vand.u32 %v53, 4294901760
    %v1335 = vsub.f32 %v53, %v1334
    %1336 = vmatpush1.msra.mxu0 %v1335
    %1337 = vmatprep.subr.mxu0 0.0
    %v1338 = vand.u32 %v54, 4294901760
    %v1339 = vsub.f32 %v54, %v1338
    %1340 = vmatpush1.msra.mxu0 %v1339
    %1341 = vmatprep.subr.mxu0 0.0
    %v1342 = vand.u32 %v55, 4294901760
    %v1343 = vsub.f32 %v55, %v1342
    %1344 = vmatpush1.msra.mxu0 %v1343
    %1345 = vmatprep.subr.mxu0 0.0
    %v1346 = vand.u32 %v56, 4294901760
    %v1347 = vsub.f32 %v56, %v1346
    %1348 = vmatpush1.msra.mxu0 %v1347
    %1349 = vmatprep.subr.mxu0 0.0
    %v1350 = vand.u32 %v57, 4294901760
    %v1351 = vsub.f32 %v57, %v1350
    %1352 = vmatpush1.msra.mxu0 %v1351
    %1353 = vmatprep.subr.mxu0 0.0
    %v1354 = vand.u32 %v58, 4294901760
    %v1355 = vsub.f32 %v58, %v1354
    %1356 = vmatpush1.msra.mxu0 %v1355
    %1357 = vmatprep.subr.mxu0 0.0
    %v1358 = vand.u32 %v59, 4294901760
    %v1359 = vsub.f32 %v59, %v1358
    %1360 = vmatpush1.msra.mxu0 %v1359
    %1361 = vmatprep.subr.mxu0 0.0
    %v1362 = vand.u32 %v60, 4294901760
    %v1363 = vsub.f32 %v60, %v1362
    %1364 = vmatpush1.msra.mxu0 %v1363
    %1365 = vmatprep.subr.mxu0 0.0
    %v1366 = vand.u32 %v61, 4294901760
    %v1367 = vsub.f32 %v61, %v1366
    %1368 = vmatpush1.msra.mxu0 %v1367
    %1369 = vmatprep.subr.mxu0 0.0
    %v1370 = vand.u32 %v62, 4294901760
    %v1371 = vsub.f32 %v62, %v1370
    %1372 = vmatpush1.msra.mxu0 %v1371
    %1373 = vmatprep.subr.mxu0 0.0
    %v1374 = vand.u32 %v63, 4294901760
    %v1375 = vsub.f32 %v63, %v1374
    %1376 = vmatpush1.msra.mxu0 %v1375
    %1377 = vmatprep.subr.mxu0 0.0
    %v1378 = vand.u32 %v64, 4294901760
    %v1379 = vsub.f32 %v64, %v1378
    %1380 = vmatpush1.msra.mxu0 %v1379
    %1381 = vmatprep.subr.mxu0 0.0
    %v1382 = vand.u32 %v65, 4294901760
    %v1383 = vsub.f32 %v65, %v1382
    %1384 = vmatpush1.msra.mxu0 %v1383
    %1385 = vmatprep.subr.mxu0 0.0
    %v1386 = vand.u32 %v66, 4294901760
    %v1387 = vsub.f32 %v66, %v1386
    %1388 = vmatpush1.msra.mxu0 %v1387
    %1389 = vmatprep.subr.mxu0 0.0
    %v1390 = vand.u32 %v67, 4294901760
    %v1391 = vsub.f32 %v67, %v1390
    %1392 = vmatpush1.msra.mxu0 %v1391
    %1393 = vmatprep.subr.mxu0 0.0
    %v1394 = vand.u32 %v68, 4294901760
    %v1395 = vsub.f32 %v68, %v1394
    %1396 = vmatpush1.msra.mxu0 %v1395
    %1397 = vmatprep.subr.mxu0 0.0
    %v1398 = vand.u32 %v69, 4294901760
    %v1399 = vsub.f32 %v69, %v1398
    %1400 = vmatpush1.msra.mxu0 %v1399
    %1401 = vmatprep.subr.mxu0 0.0
    %v1402 = vand.u32 %v70, 4294901760
    %v1403 = vsub.f32 %v70, %v1402
    %1404 = vmatpush1.msra.mxu0 %v1403
    %1405 = vmatprep.subr.mxu0 0.0
    %v1406 = vand.u32 %v71, 4294901760
    %v1407 = vsub.f32 %v71, %v1406
    %1408 = vmatpush1.msra.mxu0 %v1407
    %1409 = vmatprep.subr.mxu0 0.0
    %v1410 = vand.u32 %v72, 4294901760
    %v1411 = vsub.f32 %v72, %v1410
    %1412 = vmatpush1.msra.mxu0 %v1411
    %1413 = vmatprep.subr.mxu0 0.0
    %v1414 = vand.u32 %v73, 4294901760
    %v1415 = vsub.f32 %v73, %v1414
    %1416 = vmatpush1.msra.mxu0 %v1415
    %1417 = vmatprep.subr.mxu0 0.0
    %v1418 = vand.u32 %v74, 4294901760
    %v1419 = vsub.f32 %v74, %v1418
    %1420 = vmatpush1.msra.mxu0 %v1419
    %1421 = vmatprep.subr.mxu0 0.0
    %v1422 = vand.u32 %v75, 4294901760
    %v1423 = vsub.f32 %v75, %v1422
    %1424 = vmatpush1.msra.mxu0 %v1423
    %1425 = vmatprep.subr.mxu0 0.0
    %v1426 = vand.u32 %v76, 4294901760
    %v1427 = vsub.f32 %v76, %v1426
    %1428 = vmatpush1.msra.mxu0 %v1427
    %1429 = vmatprep.subr.mxu0 0.0
    %v1430 = vand.u32 %v77, 4294901760
    %v1431 = vsub.f32 %v77, %v1430
    %1432 = vmatpush1.msra.mxu0 %v1431
    %1433 = vmatprep.subr.mxu0 0.0
    %v1434 = vand.u32 %v78, 4294901760
    %v1435 = vsub.f32 %v78, %v1434
    %1436 = vmatpush1.msra.mxu0 %v1435
    %1437 = vmatprep.subr.mxu0 0.0
    %v1438 = vand.u32 %v79, 4294901760
    %v1439 = vsub.f32 %v79, %v1438
    %1440 = vmatpush1.msra.mxu0 %v1439
    %1441 = vmatprep.subr.mxu0 0.0
    %v1442 = vand.u32 %v80, 4294901760
    %v1443 = vsub.f32 %v80, %v1442
    %1444 = vmatpush1.msra.mxu0 %v1443
    %1445 = vmatprep.subr.mxu0 0.0
    %v1446 = vand.u32 %v81, 4294901760
    %v1447 = vsub.f32 %v81, %v1446
    %1448 = vmatpush1.msra.mxu0 %v1447
    %1449 = vmatprep.subr.mxu0 0.0
    %v1450 = vand.u32 %v82, 4294901760
    %v1451 = vsub.f32 %v82, %v1450
    %1452 = vmatpush1.msra.mxu0 %v1451
    %1453 = vmatprep.subr.mxu0 0.0
    %v1454 = vand.u32 %v83, 4294901760
    %v1455 = vsub.f32 %v83, %v1454
    %1456 = vmatpush1.msra.mxu0 %v1455
    %v1457 = vand.u32 %v984, 4294901760
    %v1458 = vsub.f32 %v984, %v1457
    %1459 = vmatprep.mubr.f32.mxu0 %v1458
    %v1460 = vand.u32 %v982, 4294901760
    %v1461 = vsub.f32 %v982, %v1460
    %1462 = vmatmul.mubr.f32.gmra.mrb[0].mxu0 %v1461
    %v1463 = vpop.f32.mrb[0].mxu0
    %v1464 = vadd.f32 %v1326, %v1463
    %v1465 = vpop.f32.mrb[0].mxu0
    %1466 = vdwg.mxu0
    %1467 = vmatprep.subr.mxu0 0.0
    %v1468 = vand.u32 %v52, 4294901760
    %1469 = vmatpush1.msra.mxu0 %v1468
    %1470 = vmatprep.subr.mxu0 0.0
    %v1471 = vand.u32 %v53, 4294901760
    %1472 = vmatpush1.msra.mxu0 %v1471
    %1473 = vmatprep.subr.mxu0 0.0
    %v1474 = vand.u32 %v54, 4294901760
    %1475 = vmatpush1.msra.mxu0 %v1474
    %1476 = vmatprep.subr.mxu0 0.0
    %v1477 = vand.u32 %v55, 4294901760
    %1478 = vmatpush1.msra.mxu0 %v1477
    %1479 = vmatprep.subr.mxu0 0.0
    %v1480 = vand.u32 %v56, 4294901760
    %1481 = vmatpush1.msra.mxu0 %v1480
    %1482 = vmatprep.subr.mxu0 0.0
    %v1483 = vand.u32 %v57, 4294901760
    %1484 = vmatpush1.msra.mxu0 %v1483
    %1485 = vmatprep.subr.mxu0 0.0
    %v1486 = vand.u32 %v58, 4294901760
    %1487 = vmatpush1.msra.mxu0 %v1486
    %1488 = vmatprep.subr.mxu0 0.0
    %v1489 = vand.u32 %v59, 4294901760
    %1490 = vmatpush1.msra.mxu0 %v1489
    %1491 = vmatprep.subr.mxu0 0.0
    %v1492 = vand.u32 %v60, 4294901760
    %1493 = vmatpush1.msra.mxu0 %v1492
    %1494 = vmatprep.subr.mxu0 0.0
    %v1495 = vand.u32 %v61, 4294901760
    %1496 = vmatpush1.msra.mxu0 %v1495
    %1497 = vmatprep.subr.mxu0 0.0
    %v1498 = vand.u32 %v62, 4294901760
    %1499 = vmatpush1.msra.mxu0 %v1498
    %1500 = vmatprep.subr.mxu0 0.0
    %v1501 = vand.u32 %v63, 4294901760
    %1502 = vmatpush1.msra.mxu0 %v1501
    %1503 = vmatprep.subr.mxu0 0.0
    %v1504 = vand.u32 %v64, 4294901760
    %1505 = vmatpush1.msra.mxu0 %v1504
    %1506 = vmatprep.subr.mxu0 0.0
    %v1507 = vand.u32 %v65, 4294901760
    %1508 = vmatpush1.msra.mxu0 %v1507
    %1509 = vmatprep.subr.mxu0 0.0
    %v1510 = vand.u32 %v66, 4294901760
    %1511 = vmatpush1.msra.mxu0 %v1510
    %1512 = vmatprep.subr.mxu0 0.0
    %v1513 = vand.u32 %v67, 4294901760
    %1514 = vmatpush1.msra.mxu0 %v1513
    %1515 = vmatprep.subr.mxu0 0.0
    %v1516 = vand.u32 %v68, 4294901760
    %1517 = vmatpush1.msra.mxu0 %v1516
    %1518 = vmatprep.subr.mxu0 0.0
    %v1519 = vand.u32 %v69, 4294901760
    %1520 = vmatpush1.msra.mxu0 %v1519
    %1521 = vmatprep.subr.mxu0 0.0
    %v1522 = vand.u32 %v70, 4294901760
    %1523 = vmatpush1.msra.mxu0 %v1522
    %1524 = vmatprep.subr.mxu0 0.0
    %v1525 = vand.u32 %v71, 4294901760
    %1526 = vmatpush1.msra.mxu0 %v1525
    %1527 = vmatprep.subr.mxu0 0.0
    %v1528 = vand.u32 %v72, 4294901760
    %1529 = vmatpush1.msra.mxu0 %v1528
    %1530 = vmatprep.subr.mxu0 0.0
    %v1531 = vand.u32 %v73, 4294901760
    %1532 = vmatpush1.msra.mxu0 %v1531
    %1533 = vmatprep.subr.mxu0 0.0
    %v1534 = vand.u32 %v74, 4294901760
    %1535 = vmatpush1.msra.mxu0 %v1534
    %1536 = vmatprep.subr.mxu0 0.0
    %v1537 = vand.u32 %v75, 4294901760
    %1538 = vmatpush1.msra.mxu0 %v1537
    %1539 = vmatprep.subr.mxu0 0.0
    %v1540 = vand.u32 %v76, 4294901760
    %1541 = vmatpush1.msra.mxu0 %v1540
    %1542 = vmatprep.subr.mxu0 0.0
    %v1543 = vand.u32 %v77, 4294901760
    %1544 = vmatpush1.msra.mxu0 %v1543
    %1545 = vmatprep.subr.mxu0 0.0
    %v1546 = vand.u32 %v78, 4294901760
    %1547 = vmatpush1.msra.mxu0 %v1546
    %1548 = vmatprep.subr.mxu0 0.0
    %v1549 = vand.u32 %v79, 4294901760
    %1550 = vmatpush1.msra.mxu0 %v1549
    %1551 = vmatprep.subr.mxu0 0.0
    %v1552 = vand.u32 %v80, 4294901760
    %1553 = vmatpush1.msra.mxu0 %v1552
    %1554 = vmatprep.subr.mxu0 0.0
    %v1555 = vand.u32 %v81, 4294901760
    %1556 = vmatpush1.msra.mxu0 %v1555
    %1557 = vmatprep.subr.mxu0 0.0
    %v1558 = vand.u32 %v82, 4294901760
    %1559 = vmatpush1.msra.mxu0 %v1558
    %1560 = vmatprep.subr.mxu0 0.0
    %v1561 = vand.u32 %v83, 4294901760
    %1562 = vmatpush1.msra.mxu0 %v1561
    %v1563 = vand.u32 %v984, 4294901760
    %v1564 = vsub.f32 %v984, %v1563
    %v1565 = vand.u32 %v1564, 4294901760
    %1566 = vmatprep.mubr.f32.mxu0 %v1565
    %v1567 = vand.u32 %v982, 4294901760
    %v1568 = vsub.f32 %v982, %v1567
    %v1569 = vand.u32 %v1568, 4294901760
    %1570 = vmatmul.mubr.f32.gmra.mrb[0].mxu0 %v1569
    %v1571 = vpop.f32.mrb[0].mxu0
    %v1572 = vadd.f32 %v1464, %v1571
    %v1573 = vpop.f32.mrb[0].mxu0
    %1574 = vdwg.mxu0
    %1575 = vmatprep.subr.mxu0 0.0
    %v1576 = vand.u32 %v52, 4294901760
    %v1577 = vsub.f32 %v52, %v1576
    %v1578 = vand.u32 %v1577, 4294901760
    %1579 = vmatpush1.msra.mxu0 %v1578
    %1580 = vmatprep.subr.mxu0 0.0
    %v1581 = vand.u32 %v53, 4294901760
    %v1582 = vsub.f32 %v53, %v1581
    %v1583 = vand.u32 %v1582, 4294901760
    %1584 = vmatpush1.msra.mxu0 %v1583
    %1585 = vmatprep.subr.mxu0 0.0
    %v1586 = vand.u32 %v54, 4294901760
    %v1587 = vsub.f32 %v54, %v1586
    %v1588 = vand.u32 %v1587, 4294901760
    %1589 = vmatpush1.msra.mxu0 %v1588
    %1590 = vmatprep.subr.mxu0 0.0
    %v1591 = vand.u32 %v55, 4294901760
    %v1592 = vsub.f32 %v55, %v1591
    %v1593 = vand.u32 %v1592, 4294901760
    %1594 = vmatpush1.msra.mxu0 %v1593
    %1595 = vmatprep.subr.mxu0 0.0
    %v1596 = vand.u32 %v56, 4294901760
    %v1597 = vsub.f32 %v56, %v1596
    %v1598 = vand.u32 %v1597, 4294901760
    %1599 = vmatpush1.msra.mxu0 %v1598
    %1600 = vmatprep.subr.mxu0 0.0
    %v1601 = vand.u32 %v57, 4294901760
    %v1602 = vsub.f32 %v57, %v1601
    %v1603 = vand.u32 %v1602, 4294901760
    %1604 = vmatpush1.msra.mxu0 %v1603
    %1605 = vmatprep.subr.mxu0 0.0
    %v1606 = vand.u32 %v58, 4294901760
    %v1607 = vsub.f32 %v58, %v1606
    %v1608 = vand.u32 %v1607, 4294901760
    %1609 = vmatpush1.msra.mxu0 %v1608
    %1610 = vmatprep.subr.mxu0 0.0
    %v1611 = vand.u32 %v59, 4294901760
    %v1612 = vsub.f32 %v59, %v1611
    %v1613 = vand.u32 %v1612, 4294901760
    %1614 = vmatpush1.msra.mxu0 %v1613
    %1615 = vmatprep.subr.mxu0 0.0
    %v1616 = vand.u32 %v60, 4294901760
    %v1617 = vsub.f32 %v60, %v1616
    %v1618 = vand.u32 %v1617, 4294901760
    %1619 = vmatpush1.msra.mxu0 %v1618
    %1620 = vmatprep.subr.mxu0 0.0
    %v1621 = vand.u32 %v61, 4294901760
    %v1622 = vsub.f32 %v61, %v1621
    %v1623 = vand.u32 %v1622, 4294901760
    %1624 = vmatpush1.msra.mxu0 %v1623
    %1625 = vmatprep.subr.mxu0 0.0
    %v1626 = vand.u32 %v62, 4294901760
    %v1627 = vsub.f32 %v62, %v1626
    %v1628 = vand.u32 %v1627, 4294901760
    %1629 = vmatpush1.msra.mxu0 %v1628
    %1630 = vmatprep.subr.mxu0 0.0
    %v1631 = vand.u32 %v63, 4294901760
    %v1632 = vsub.f32 %v63, %v1631
    %v1633 = vand.u32 %v1632, 4294901760
    %1634 = vmatpush1.msra.mxu0 %v1633
    %1635 = vmatprep.subr.mxu0 0.0
    %v1636 = vand.u32 %v64, 4294901760
    %v1637 = vsub.f32 %v64, %v1636
    %v1638 = vand.u32 %v1637, 4294901760
    %1639 = vmatpush1.msra.mxu0 %v1638
    %1640 = vmatprep.subr.mxu0 0.0
    %v1641 = vand.u32 %v65, 4294901760
    %v1642 = vsub.f32 %v65, %v1641
    %v1643 = vand.u32 %v1642, 4294901760
    %1644 = vmatpush1.msra.mxu0 %v1643
    %1645 = vmatprep.subr.mxu0 0.0
    %v1646 = vand.u32 %v66, 4294901760
    %v1647 = vsub.f32 %v66, %v1646
    %v1648 = vand.u32 %v1647, 4294901760
    %1649 = vmatpush1.msra.mxu0 %v1648
    %1650 = vmatprep.subr.mxu0 0.0
    %v1651 = vand.u32 %v67, 4294901760
    %v1652 = vsub.f32 %v67, %v1651
    %v1653 = vand.u32 %v1652, 4294901760
    %1654 = vmatpush1.msra.mxu0 %v1653
    %1655 = vmatprep.subr.mxu0 0.0
    %v1656 = vand.u32 %v68, 4294901760
    %v1657 = vsub.f32 %v68, %v1656
    %v1658 = vand.u32 %v1657, 4294901760
    %1659 = vmatpush1.msra.mxu0 %v1658
    %1660 = vmatprep.subr.mxu0 0.0
    %v1661 = vand.u32 %v69, 4294901760
    %v1662 = vsub.f32 %v69, %v1661
    %v1663 = vand.u32 %v1662, 4294901760
    %1664 = vmatpush1.msra.mxu0 %v1663
    %1665 = vmatprep.subr.mxu0 0.0
    %v1666 = vand.u32 %v70, 4294901760
    %v1667 = vsub.f32 %v70, %v1666
    %v1668 = vand.u32 %v1667, 4294901760
    %1669 = vmatpush1.msra.mxu0 %v1668
    %1670 = vmatprep.subr.mxu0 0.0
    %v1671 = vand.u32 %v71, 4294901760
    %v1672 = vsub.f32 %v71, %v1671
    %v1673 = vand.u32 %v1672, 4294901760
    %1674 = vmatpush1.msra.mxu0 %v1673
    %1675 = vmatprep.subr.mxu0 0.0
    %v1676 = vand.u32 %v72, 4294901760
    %v1677 = vsub.f32 %v72, %v1676
    %v1678 = vand.u32 %v1677, 4294901760
    %1679 = vmatpush1.msra.mxu0 %v1678
    %1680 = vmatprep.subr.mxu0 0.0
    %v1681 = vand.u32 %v73, 4294901760
    %v1682 = vsub.f32 %v73, %v1681
    %v1683 = vand.u32 %v1682, 4294901760
    %1684 = vmatpush1.msra.mxu0 %v1683
    %1685 = vmatprep.subr.mxu0 0.0
    %v1686 = vand.u32 %v74, 4294901760
    %v1687 = vsub.f32 %v74, %v1686
    %v1688 = vand.u32 %v1687, 4294901760
    %1689 = vmatpush1.msra.mxu0 %v1688
    %1690 = vmatprep.subr.mxu0 0.0
    %v1691 = vand.u32 %v75, 4294901760
    %v1692 = vsub.f32 %v75, %v1691
    %v1693 = vand.u32 %v1692, 4294901760
    %1694 = vmatpush1.msra.mxu0 %v1693
    %1695 = vmatprep.subr.mxu0 0.0
    %v1696 = vand.u32 %v76, 4294901760
    %v1697 = vsub.f32 %v76, %v1696
    %v1698 = vand.u32 %v1697, 4294901760
    %1699 = vmatpush1.msra.mxu0 %v1698
    %1700 = vmatprep.subr.mxu0 0.0
    %v1701 = vand.u32 %v77, 4294901760
    %v1702 = vsub.f32 %v77, %v1701
    %v1703 = vand.u32 %v1702, 4294901760
    %1704 = vmatpush1.msra.mxu0 %v1703
    %1705 = vmatprep.subr.mxu0 0.0
    %v1706 = vand.u32 %v78, 4294901760
    %v1707 = vsub.f32 %v78, %v1706
    %v1708 = vand.u32 %v1707, 4294901760
    %1709 = vmatpush1.msra.mxu0 %v1708
    %1710 = vmatprep.subr.mxu0 0.0
    %v1711 = vand.u32 %v79, 4294901760
    %v1712 = vsub.f32 %v79, %v1711
    %v1713 = vand.u32 %v1712, 4294901760
    %1714 = vmatpush1.msra.mxu0 %v1713
    %1715 = vmatprep.subr.mxu0 0.0
    %v1716 = vand.u32 %v80, 4294901760
    %v1717 = vsub.f32 %v80, %v1716
    %v1718 = vand.u32 %v1717, 4294901760
    %1719 = vmatpush1.msra.mxu0 %v1718
    %1720 = vmatprep.subr.mxu0 0.0
    %v1721 = vand.u32 %v81, 4294901760
    %v1722 = vsub.f32 %v81, %v1721
    %v1723 = vand.u32 %v1722, 4294901760
    %1724 = vmatpush1.msra.mxu0 %v1723
    %1725 = vmatprep.subr.mxu0 0.0
    %v1726 = vand.u32 %v82, 4294901760
    %v1727 = vsub.f32 %v82, %v1726
    %v1728 = vand.u32 %v1727, 4294901760
    %1729 = vmatpush1.msra.mxu0 %v1728
    %1730 = vmatprep.subr.mxu0 0.0
    %v1731 = vand.u32 %v83, 4294901760
    %v1732 = vsub.f32 %v83, %v1731
    %v1733 = vand.u32 %v1732, 4294901760
    %1734 = vmatpush1.msra.mxu0 %v1733
    %v1735 = vand.u32 %v984, 4294901760
    %1736 = vmatprep.mubr.f32.mxu0 %v1735
    %v1737 = vand.u32 %v982, 4294901760
    %1738 = vmatmul.mubr.f32.gmra.mrb[0].mxu0 %v1737
    %v1739 = vpop.f32.mrb[0].mxu0
    %v1740 = vadd.f32 %v1572, %v1739
    %v1741 = vpop.f32.mrb[0].mxu0
    %1742 = vdwg.mxu0
    %1743 = vmatprep.subr.mxu0 0.0
    %v1744 = vand.u32 %v52, 4294901760
    %1745 = vmatpush1.msra.mxu0 %v1744
    %1746 = vmatprep.subr.mxu0 0.0
    %v1747 = vand.u32 %v53, 4294901760
    %1748 = vmatpush1.msra.mxu0 %v1747
    %1749 = vmatprep.subr.mxu0 0.0
    %v1750 = vand.u32 %v54, 4294901760
    %1751 = vmatpush1.msra.mxu0 %v1750
    %1752 = vmatprep.subr.mxu0 0.0
    %v1753 = vand.u32 %v55, 4294901760
    %1754 = vmatpush1.msra.mxu0 %v1753
    %1755 = vmatprep.subr.mxu0 0.0
    %v1756 = vand.u32 %v56, 4294901760
    %1757 = vmatpush1.msra.mxu0 %v1756
    %1758 = vmatprep.subr.mxu0 0.0
    %v1759 = vand.u32 %v57, 4294901760
    %1760 = vmatpush1.msra.mxu0 %v1759
    %1761 = vmatprep.subr.mxu0 0.0
    %v1762 = vand.u32 %v58, 4294901760
    %1763 = vmatpush1.msra.mxu0 %v1762
    %1764 = vmatprep.subr.mxu0 0.0
    %v1765 = vand.u32 %v59, 4294901760
    %1766 = vmatpush1.msra.mxu0 %v1765
    %1767 = vmatprep.subr.mxu0 0.0
    %v1768 = vand.u32 %v60, 4294901760
    %1769 = vmatpush1.msra.mxu0 %v1768
    %1770 = vmatprep.subr.mxu0 0.0
    %v1771 = vand.u32 %v61, 4294901760
    %1772 = vmatpush1.msra.mxu0 %v1771
    %1773 = vmatprep.subr.mxu0 0.0
    %v1774 = vand.u32 %v62, 4294901760
    %1775 = vmatpush1.msra.mxu0 %v1774
    %1776 = vmatprep.subr.mxu0 0.0
    %v1777 = vand.u32 %v63, 4294901760
    %1778 = vmatpush1.msra.mxu0 %v1777
    %1779 = vmatprep.subr.mxu0 0.0
    %v1780 = vand.u32 %v64, 4294901760
    %1781 = vmatpush1.msra.mxu0 %v1780
    %1782 = vmatprep.subr.mxu0 0.0
    %v1783 = vand.u32 %v65, 4294901760
    %1784 = vmatpush1.msra.mxu0 %v1783
    %1785 = vmatprep.subr.mxu0 0.0
    %v1786 = vand.u32 %v66, 4294901760
    %1787 = vmatpush1.msra.mxu0 %v1786
    %1788 = vmatprep.subr.mxu0 0.0
    %v1789 = vand.u32 %v67, 4294901760
    %1790 = vmatpush1.msra.mxu0 %v1789
    %1791 = vmatprep.subr.mxu0 0.0
    %v1792 = vand.u32 %v68, 4294901760
    %1793 = vmatpush1.msra.mxu0 %v1792
    %1794 = vmatprep.subr.mxu0 0.0
    %v1795 = vand.u32 %v69, 4294901760
    %1796 = vmatpush1.msra.mxu0 %v1795
    %1797 = vmatprep.subr.mxu0 0.0
    %v1798 = vand.u32 %v70, 4294901760
    %1799 = vmatpush1.msra.mxu0 %v1798
    %1800 = vmatprep.subr.mxu0 0.0
    %v1801 = vand.u32 %v71, 4294901760
    %1802 = vmatpush1.msra.mxu0 %v1801
    %1803 = vmatprep.subr.mxu0 0.0
    %v1804 = vand.u32 %v72, 4294901760
    %1805 = vmatpush1.msra.mxu0 %v1804
    %1806 = vmatprep.subr.mxu0 0.0
    %v1807 = vand.u32 %v73, 4294901760
    %1808 = vmatpush1.msra.mxu0 %v1807
    %1809 = vmatprep.subr.mxu0 0.0
    %v1810 = vand.u32 %v74, 4294901760
    %1811 = vmatpush1.msra.mxu0 %v1810
    %1812 = vmatprep.subr.mxu0 0.0
    %v1813 = vand.u32 %v75, 4294901760
    %1814 = vmatpush1.msra.mxu0 %v1813
    %1815 = vmatprep.subr.mxu0 0.0
    %v1816 = vand.u32 %v76, 4294901760
    %1817 = vmatpush1.msra.mxu0 %v1816
    %1818 = vmatprep.subr.mxu0 0.0
    %v1819 = vand.u32 %v77, 4294901760
    %1820 = vmatpush1.msra.mxu0 %v1819
    %1821 = vmatprep.subr.mxu0 0.0
    %v1822 = vand.u32 %v78, 4294901760
    %1823 = vmatpush1.msra.mxu0 %v1822
    %1824 = vmatprep.subr.mxu0 0.0
    %v1825 = vand.u32 %v79, 4294901760
    %1826 = vmatpush1.msra.mxu0 %v1825
    %1827 = vmatprep.subr.mxu0 0.0
    %v1828 = vand.u32 %v80, 4294901760
    %1829 = vmatpush1.msra.mxu0 %v1828
    %1830 = vmatprep.subr.mxu0 0.0
    %v1831 = vand.u32 %v81, 4294901760
    %1832 = vmatpush1.msra.mxu0 %v1831
    %1833 = vmatprep.subr.mxu0 0.0
    %v1834 = vand.u32 %v82, 4294901760
    %1835 = vmatpush1.msra.mxu0 %v1834
    %1836 = vmatprep.subr.mxu0 0.0
    %v1837 = vand.u32 %v83, 4294901760
    %1838 = vmatpush1.msra.mxu0 %v1837
    %v1839 = vand.u32 %v984, 4294901760
    %1840 = vmatprep.mubr.f32.mxu0 %v1839
    %v1841 = vand.u32 %v982, 4294901760
    %1842 = vmatmul.mubr.f32.gmra.mrb[0].mxu0 %v1841
    %v1843 = vpop.f32.mrb[0].mxu0
    %v1844 = vadd.f32 %v1740, %v1843
    %v1845 = vpop.f32.mrb[0].mxu0
    %1846 = vdwg.mxu0
    %v1847 = vrcp.pop %v1844
    %v1848 = vmul.f32 1.0, %v1847
    %1850 = vrot.lane.b32.xlu0 %v1848, 1
    %v1851 = vpop.permute.xlu0 %1850
    %v1853 = vmul.f32 %v1844, %v1851
    %v1854 = vsub.f32 %v1853, 8.0
    %1855 = vrot.lane.b32.xlu0 %v1848, 2
    %v1856 = vpop.permute.xlu0 %1855
    %v1858 = vmul.f32 %v1844, %v1856
    %v1859 = vsub.f32 %v1858, 8.0
    %v1860 = vmul.f32 %v966, 0.0
    %v1861 = vadd.f32 %v1860, -1800.0
    %v1862 = vmul.f32 %v971, 0.0
    %v1863 = vadd.f32 %v1862, 0.0
    %v1864 = vadd.f32 %v971, 0.0
    %v1865 = vadd.f32 %v1862, 1800.0
    %v1866 = vadd.f32 %v1854, 0.0
    %v1867 = vmul.f32 %v1854, 0.0
    %v1868 = vadd.f32 %v1867, 1800.0
    %v1869 = vadd.f32 %v1867, 0.0
    %v1870 = vadd.f32 %v1859, 0.0
    %v1871 = vmul.f32 %v1859, 0.0
    %v1872 = vadd.f32 %v1871, 0.0
    %v1873 = vadd.f32 %v1871, 1800.0
    %v1874 = vmul.f32 %v966, -900.0
    %v1875 = vmul.f32 %v966, 700.0
    %v1876 = vsub.f32 %v1874, %v1875
    %v1877 = vmul.f32 %v971, -900.0
    %v1878 = vmul.f32 %v971, 700.0
    %v1879 = vadd.f32 %v1878, 0.0
    %v1880 = vsub.f32 %v1877, %v1879
    %v1881 = vmul.f32 %v1854, -900.0
    %v1882 = vmul.f32 %v1854, 700.0
    %v1883 = vadd.f32 %v1882, 0.0
    %v1884 = vsub.f32 %v1881, %v1883
    %v1885 = vmul.f32 %v1859, -900.0
    %v1886 = vmul.f32 %v1859, 700.0
    %v1887 = vadd.f32 %v1886, 0.0
    %v1888 = vsub.f32 %v1885, %v1887
    %v1889 = vmul.f32 %v1861, %v1861
    %v1890 = vadd.f32 %v1889, 0.0
    %v1891 = vmul.f32 %v1863, %v1863
    %1893 = vrot.lane.b32.xlu0 %v1891, 127
    %v1894 = vpop.permute.xlu0 %1893
    %v1896 = vadd.f32 %v1890, %v1894
    %v1897 = vmul.f32 %v1866, %v1866
    %v1898 = vadd.f32 %v1896, %v1897
    %v1899 = vmul.f32 %v1870, %v1870
    %1901 = vrot.lane.b32.xlu0 %v1899, 127
    %v1902 = vpop.permute.xlu0 %1901
    %v1904 = vadd.f32 %v1898, %v1902
    %v1905 = vmul.f32 %v1861, %v966
    %v1906 = vadd.f32 %v1905, 0.0
    %v1907 = vmul.f32 %v1863, %v1864
    %1909 = vrot.lane.b32.xlu0 %v1907, 127
    %v1910 = vpop.permute.xlu0 %1909
    %v1912 = vadd.f32 %v1906, %v1910
    %v1913 = vmul.f32 %v1866, %v1868
    %v1914 = vadd.f32 %v1912, %v1913
    %v1915 = vmul.f32 %v1870, %v1872
    %1917 = vrot.lane.b32.xlu0 %v1915, 127
    %v1918 = vpop.permute.xlu0 %1917
    %v1920 = vadd.f32 %v1914, %v1918
    %v1921 = vmul.f32 %v1861, %v1860
    %v1922 = vadd.f32 %v1921, 0.0
    %v1923 = vmul.f32 %v1863, %v1865
    %1925 = vrot.lane.b32.xlu0 %v1923, 127
    %v1926 = vpop.permute.xlu0 %1925
    %v1928 = vadd.f32 %v1922, %v1926
    %v1929 = vmul.f32 %v1866, %v1869
    %v1930 = vadd.f32 %v1928, %v1929
    %v1931 = vmul.f32 %v1870, %v1873
    %1933 = vrot.lane.b32.xlu0 %v1931, 127
    %v1934 = vpop.permute.xlu0 %1933
    %v1936 = vadd.f32 %v1930, %v1934
    %v1937 = vmul.f32 %v966, %v966
    %v1938 = vadd.f32 %v1937, 0.0
    %v1939 = vmul.f32 %v1864, %v1864
    %1941 = vrot.lane.b32.xlu0 %v1939, 127
    %v1942 = vpop.permute.xlu0 %1941
    %v1944 = vadd.f32 %v1938, %v1942
    %v1945 = vmul.f32 %v1868, %v1868
    %v1946 = vadd.f32 %v1944, %v1945
    %v1947 = vmul.f32 %v1872, %v1872
    %1949 = vrot.lane.b32.xlu0 %v1947, 127
    %v1950 = vpop.permute.xlu0 %1949
    %v1952 = vadd.f32 %v1946, %v1950
    %v1953 = vmul.f32 %v966, %v1860
    %v1954 = vadd.f32 %v1953, 0.0
    %v1955 = vmul.f32 %v1864, %v1865
    %1957 = vrot.lane.b32.xlu0 %v1955, 127
    %v1958 = vpop.permute.xlu0 %1957
    %v1960 = vadd.f32 %v1954, %v1958
    %v1961 = vmul.f32 %v1868, %v1869
    %v1962 = vadd.f32 %v1960, %v1961
    %v1963 = vmul.f32 %v1872, %v1873
    %1965 = vrot.lane.b32.xlu0 %v1963, 127
    %v1966 = vpop.permute.xlu0 %1965
    %v1968 = vadd.f32 %v1962, %v1966
    %v1969 = vmul.f32 %v1860, %v1860
    %v1970 = vadd.f32 %v1969, 0.0
    %v1971 = vmul.f32 %v1865, %v1865
    %1973 = vrot.lane.b32.xlu0 %v1971, 127
    %v1974 = vpop.permute.xlu0 %1973
    %v1976 = vadd.f32 %v1970, %v1974
    %v1977 = vmul.f32 %v1869, %v1869
    %v1978 = vadd.f32 %v1976, %v1977
    %v1979 = vmul.f32 %v1873, %v1873
    %1981 = vrot.lane.b32.xlu0 %v1979, 127
    %v1982 = vpop.permute.xlu0 %1981
    %v1984 = vadd.f32 %v1978, %v1982
    %v1985 = vmul.f32 %v1861, %v1876
    %v1986 = vadd.f32 %v1985, 0.0
    %v1987 = vmul.f32 %v1863, %v1880
    %1989 = vrot.lane.b32.xlu0 %v1987, 127
    %v1990 = vpop.permute.xlu0 %1989
    %v1992 = vadd.f32 %v1986, %v1990
    %v1993 = vmul.f32 %v1866, %v1884
    %v1994 = vadd.f32 %v1992, %v1993
    %v1995 = vmul.f32 %v1870, %v1888
    %1997 = vrot.lane.b32.xlu0 %v1995, 127
    %v1998 = vpop.permute.xlu0 %1997
    %v2000 = vadd.f32 %v1994, %v1998
    %v2001 = vmul.f32 %v966, %v1876
    %v2002 = vadd.f32 %v2001, 0.0
    %v2003 = vmul.f32 %v1864, %v1880
    %2005 = vrot.lane.b32.xlu0 %v2003, 127
    %v2006 = vpop.permute.xlu0 %2005
    %v2008 = vadd.f32 %v2002, %v2006
    %v2009 = vmul.f32 %v1868, %v1884
    %v2010 = vadd.f32 %v2008, %v2009
    %v2011 = vmul.f32 %v1872, %v1888
    %2013 = vrot.lane.b32.xlu0 %v2011, 127
    %v2014 = vpop.permute.xlu0 %2013
    %v2016 = vadd.f32 %v2010, %v2014
    %v2017 = vmul.f32 %v1860, %v1876
    %v2018 = vadd.f32 %v2017, 0.0
    %v2019 = vmul.f32 %v1865, %v1880
    %2021 = vrot.lane.b32.xlu0 %v2019, 127
    %v2022 = vpop.permute.xlu0 %2021
    %v2024 = vadd.f32 %v2018, %v2022
    %v2025 = vmul.f32 %v1869, %v1884
    %v2026 = vadd.f32 %v2024, %v2025
    %v2027 = vmul.f32 %v1873, %v1888
    %2029 = vrot.lane.b32.xlu0 %v2027, 127
    %v2030 = vpop.permute.xlu0 %2029
    %v2032 = vadd.f32 %v2026, %v2030
    %v2033 = vmul.f32 %v1952, %v1984
    %v2034 = vmul.f32 %v1968, %v1968
    %v2035 = vsub.f32 %v2033, %v2034
    %v2036 = vmul.f32 %v1904, %v2035
    %v2037 = vmul.f32 %v1920, %v1984
    %v2038 = vmul.f32 %v1968, %v1936
    %v2039 = vsub.f32 %v2037, %v2038
    %v2040 = vmul.f32 %v1920, %v2039
    %v2041 = vsub.f32 %v2036, %v2040
    %v2042 = vmul.f32 %v1920, %v1968
    %v2043 = vmul.f32 %v1952, %v1936
    %v2044 = vsub.f32 %v2042, %v2043
    %v2045 = vmul.f32 %v1936, %v2044
    %v2046 = vadd.f32 %v2041, %v2045
    %v2047 = vand.u32 2147483647, %v2046
    %vm2048 = vcmp.lt.f32.partialorder %v2047, 1e-20
    %vm2049 = vcmp.lt.f32.partialorder %v2046, 0.0
    %v2050 = vsel %vm2049, -1e-20, 1e-20
    %v2051 = vsel %vm2048, %v2050, %v2046
    %v2052 = vrcp.pop %v2051
    %v2053 = vmul.f32 1.0, %v2052
    %v2054 = vmul.f32 %v2000, %v2035
    %v2055 = vmul.f32 %v2016, %v1984
    %v2056 = vmul.f32 %v1968, %v2032
    %v2057 = vsub.f32 %v2055, %v2056
    %v2058 = vmul.f32 %v1920, %v2057
    %v2059 = vsub.f32 %v2054, %v2058
    %v2060 = vmul.f32 %v2016, %v1968
    %v2061 = vmul.f32 %v1952, %v2032
    %v2062 = vsub.f32 %v2060, %v2061
    %v2063 = vmul.f32 %v1936, %v2062
    %v2064 = vadd.f32 %v2059, %v2063
    %v2065 = vmul.f32 %v2064, %v2053
    %v2066 = vadd.f32 %v2065, 127.5
    %v2067 = vmul.f32 %v1904, %v2057
    %v2068 = vmul.f32 %v2000, %v2039
    %v2069 = vsub.f32 %v2067, %v2068
    %v2070 = vmul.f32 %v1920, %v2032
    %v2071 = vmul.f32 %v2016, %v1936
    %v2072 = vsub.f32 %v2070, %v2071
    %v2073 = vmul.f32 %v1936, %v2072
    %v2074 = vadd.f32 %v2069, %v2073
    %v2075 = vmul.f32 %v2074, %v2053
    %v2076 = vadd.f32 %v2075, 127.5
    %v2077 = vsub.f32 %v2061, %v2060
    %v2078 = vmul.f32 %v1904, %v2077
    %v2079 = vmul.f32 %v1920, %v2072
    %v2080 = vsub.f32 %v2078, %v2079
    %v2081 = vmul.f32 %v2000, %v2044
    %v2082 = vadd.f32 %v2080, %v2081
    %v2083 = vmul.f32 %v2082, %v2053
    %v2084 = vadd.f32 %v2083, 127.5
    %v2085 = vlaneseq
    %v2086 = vand.u32 %v2085, 127
    %vm2087 = vcmp.eq.s32.totalorder %v2086, 0
    %2089 = vset.pattern.permute.xlu0 1
    %2090 = vperm.xlu0 %2089, %v2066
    %v2091 = vpop.permute.xlu0 %2090
    %v2093 = vsel %vm2087, %v2091, 0.0
    %vm2094 = vcmp.eq.s32.totalorder %v2086, 1
    %2096 = vset.pattern.permute.xlu0 1
    %2097 = vperm.xlu0 %2096, %v2076
    %v2098 = vpop.permute.xlu0 %2097
    %v2100 = vsel %vm2094, %v2098, 0.0
    %v2101 = vadd.f32 %v2093, %v2100
    %vm2102 = vcmp.eq.s32.totalorder %v2086, 2
    %2104 = vset.pattern.permute.xlu0 1
    %2105 = vperm.xlu0 %2104, %v2084
    %v2106 = vpop.permute.xlu0 %2105
    %v2108 = vsel %vm2102, %v2106, 0.0
    %v2109 = vadd.f32 %v2101, %v2108
    %2110 = vst [vmem:[#allocation8] sm:$0xff] %v2109
    // Predicated region
    $region26: #{tpu_custom_call.1} parent=1 // pred_check
      _
    $region27: #{tpu_custom_call.1} parent=1 // pred_check_branch
      %2112 = sbr.rel (0) target = $region29
    $region28: #{tpu_custom_call.1} parent=1 // pred_region
      %s2114 = ssub.s32 128, 128
      %2115 = vsyncadd [#allocation4], %s2114
      %s2117 = sshll.u32 [#allocation8], 4
      %s2118 = int_to_ptr.vmem [resolvable:$true] %s2117
      %2120 = dma.vmem_to_hbm [thread:$0]  %s2118, 128, %s3, [#allocation4]
    $region29: #{tpu_custom_call.1} parent=1 // pred_fallthru
      _
    // Predicated region
    $region30: #{tpu_custom_call.1} parent=1 // pred_check
      _
    $region31: #{tpu_custom_call.1} parent=1 // pred_check_branch
      %2122 = sbr.rel (0) target = $region33
    $region32: #{tpu_custom_call.1} parent=1 // pred_region
      %2123 = dma.done [#allocation4], 128
    $region33: #{tpu_custom_call.1} parent=1 // pred_fallthru
      _
    %2124 = vsyncpa [#allocation3], 1
    %2125 = vsyncpa [#allocation6], 1
    %2126 = vsyncpa [#allocation4], 1

</llo_original>
